<compile_context>
chip_gen: v6e
topology: v6e:2x2x1
jax: 0.10.0
libtpu: 0.0.40
codegen_flags: <defaults>
</compile_context>

<pallas_src>
import functools

import jax
import jax.numpy as jnp
from jax import lax
from jax.experimental import pallas as pl
from jax.experimental.pallas import tpu as pltpu


def _round_up(x, m):
    return ((x + m - 1) // m) * m


def lstm_fused_kernel(tok_ref, embproj_ref, whh_ref, wfc_ref, bfc_ref,
                      out_ref, xproj_ref, *, b_last):
    """Whole forward in one invocation: fused gather+input-proj, unrolled LSTM
    recurrence, and the FC head on the last-batch hidden state."""
    TB = tok_ref.shape[0]                 # T * Bp
    Vp, G = embproj_ref.shape             # G = 4 * H
    H = whh_ref.shape[0]
    T, Op = out_ref.shape                 # Op = lane-padded output width
    Bp = TB // T

    # ---- fused embedding gather + input projection (one MXU matmul) --------
    # xproj[t*Bp + b] = emb[tok[t, b]] @ W_ih^T + (b_ih + b_hh)
    # TODO(synk): for production-sized vocabularies replace the one-hot matmul
    # with a DMA row gather; at V=50 the one-hot is the cheapest MXU-friendly form.
    tok = tok_ref[...]                                            # (TB, 1) int32
    vocab_iota = lax.broadcasted_iota(jnp.int32, (TB, Vp), 1)
    onehot = (vocab_iota == tok).astype(jnp.float32)              # (TB, Vp)
    xproj_ref[...] = jnp.dot(onehot, embproj_ref[...],
                             preferred_element_type=jnp.float32)  # (TB, 4H)

    whh = whh_ref[...]                                            # (H, 4H)
    t_iota = lax.broadcasted_iota(jnp.int32, (T, H), 0)           # hoisted

    def step(t, carry):
        h, c, hlast = carry
        base = pl.multiple_of(t * Bp, 8)
        x_t = xproj_ref[pl.ds(base, Bp), :]                       # (Bp, 4H)
        # only the recurrent matmul remains on the serial critical path
        gates = x_t + jnp.dot(h, whh, preferred_element_type=jnp.float32)
        i = jax.nn.sigmoid(gates[:, 0:H])
        f = jax.nn.sigmoid(gates[:, H:2 * H])
        g = jnp.tanh(gates[:, 2 * H:3 * H])
        o = jax.nn.sigmoid(gates[:, 3 * H:4 * H])
        c_new = f * c + i * g
        h_new = o * jnp.tanh(c_new)
        # collect hidden state of the last (real) batch element for timestep t
        row = h_new[b_last:b_last + 1, :]                         # (1, H)
        hlast = jnp.where(t_iota == t, row, hlast)                # (T, H)
        return h_new, c_new, hlast

    h0 = jnp.zeros((Bp, H), jnp.float32)
    c0 = jnp.zeros((Bp, H), jnp.float32)
    hl0 = jnp.zeros((T, H), jnp.float32)
    _, _, hlast = lax.fori_loop(0, T, step, (h0, c0, hl0), unroll=True)

    # FC head once: (T, H) @ (H, Op) + bias -> single unmasked lane-dense store.
    out_ref[...] = (jnp.dot(hlast, wfc_ref[...],
                            preferred_element_type=jnp.float32)
                    + bfc_ref[...])


def sentiment_classifier_forward(tokens, params):
    emb, w_ih, w_hh, b_ih, b_hh, w_fc, b_fc = params
    T, B = tokens.shape
    V, H = emb.shape
    O = w_fc.shape[0]

    Bp = _round_up(B, 8)        # pad batch to native sublane count
    Vp = _round_up(V, 128)      # lane-dense one-hot
    Op = _round_up(O, 128)      # lane-dense FC output (unmasked vst)

    # Weight-only preprocessing (no activation HBM round trips):
    emb_proj = (emb.astype(jnp.float32) @ w_ih.T.astype(jnp.float32)
                + (b_ih + b_hh)[None, :].astype(jnp.float32))        # (V, 4H)
    emb_proj = jnp.pad(emb_proj, ((0, Vp - V), (0, 0)))              # (Vp, 4H)
    whh_t = w_hh.T.astype(jnp.float32)                               # (H, 4H)
    wfc_t = jnp.pad(w_fc.T.astype(jnp.float32), ((0, 0), (0, Op - O)))  # (H, Op)
    bfc = jnp.pad(b_fc.astype(jnp.float32), ((0, Op - O),))[None, :]    # (1, Op)

    # pad batch with token 0 (results of padded rows are ignored)
    tok_pad = jnp.pad(tokens.astype(jnp.int32), ((0, 0), (0, Bp - B)))  # (T, Bp)
    tok_col = tok_pad.reshape(T * Bp, 1)                                # (T*Bp, 1)

    kernel = functools.partial(lstm_fused_kernel, b_last=B - 1)

    out = pl.pallas_call(
        kernel,
        out_shape=jax.ShapeDtypeStruct((T, Op), jnp.float32),
        scratch_shapes=[pltpu.VMEM((T * Bp, 4 * H), jnp.float32)],   # xproj
    )(tok_col, emb_proj, whh_t, wfc_t, bfc)
    return out[:, :O]                                                 # (T, O)


def reference_forward(tokens, params):
    """Pure-JAX reference matching PyTorch semantics (for verification)."""
    emb, w_ih, w_hh, b_ih, b_hh, w_fc, b_fc = params
    H = emb.shape[1]
    B = tokens.shape[1]
    x = jnp.take(emb, tokens, axis=0).astype(jnp.float32)

    def step(carry, x_t):
        h, c = carry
        gates = x_t @ w_ih.T + b_ih + h @ w_hh.T + b_hh
        i = jax.nn.sigmoid(gates[:, :H])
        f = jax.nn.sigmoid(gates[:, H:2 * H])
        g = jnp.tanh(gates[:, 2 * H:3 * H])
        o = jax.nn.sigmoid(gates[:, 3 * H:])
        c = f * c + i * g
        h = o * jnp.tanh(c)
        return (h, c), h

    init = (jnp.zeros((B, H), jnp.float32), jnp.zeros((B, H), jnp.float32))
    _, hs = lax.scan(step, init, x)          # (T, B, H)
    last = hs[:, -1, :]                      # (T, H)  == torch x[:, -1, :]
    return last @ w_fc.T + b_fc


def init_params(key, vocab_size, hidden_size, output_size):
    """Deterministic synthetic parameters with PyTorch-like init ranges."""
    k = jax.random.split(key, 7)
    H = hidden_size
    bound = 1.0 / jnp.sqrt(H)
    emb = jax.random.normal(k[0], (vocab_size, H), jnp.float32)
    w_ih = jax.random.uniform(k[1], (4 * H, H), jnp.float32, -bound, bound)
    w_hh = jax.random.uniform(k[2], (4 * H, H), jnp.float32, -bound, bound)
    b_ih = jax.random.uniform(k[3], (4 * H,), jnp.float32, -bound, bound)
    b_hh = jax.random.uniform(k[4], (4 * H,), jnp.float32, -bound, bound)
    w_fc = jax.random.uniform(k[5], (output_size, H), jnp.float32, -bound, bound)
    b_fc = jax.random.uniform(k[6], (output_size,), jnp.float32, -bound, bound)
    return (emb, w_ih, w_hh, b_ih, b_hh, w_fc, b_fc)


if __name__ == "__main__":
    vocab_size, hidden_size, output_size = 50, 32, 3
    T, B = 8, 4                                     # seq_len, batch

    key = jax.random.PRNGKey(0)
    kp, kx = jax.random.split(key)
    params = init_params(kp, vocab_size, hidden_size, output_size)
    tokens = jax.random.randint(kx, (T, B), 0, vocab_size, dtype=jnp.int32)

    out = sentiment_classifier_forward(tokens, params)
    out = jax.block_until_ready(out)

    ref = jax.block_until_ready(reference_forward(tokens, params))
    assert out.shape == (T, output_size)
    assert jnp.allclose(out, ref, atol=1e-4, rtol=1e-4), (out, ref)

    print("KERNEL_OK")
</pallas_src>

<mosaic_0001>
module attributes {stable_mosaic.version = 11 : i64} {
  func.func @lstm_fused_kernel(%arg0: memref<64x1xi32, #tpu.memory_space<vmem>>, %arg1: memref<128x128xf32, #tpu.memory_space<vmem>>, %arg2: memref<32x128xf32, #tpu.memory_space<vmem>>, %arg3: memref<32x128xf32, #tpu.memory_space<vmem>>, %arg4: memref<1x128xf32, #tpu.memory_space<vmem>>, %arg5: memref<8x128xf32, #tpu.memory_space<vmem>>, %arg6: memref<64x128xf32, #tpu.memory_space<vmem>>) attributes {dimension_semantics = [], scalar_prefetch = 0 : i64, scratch_operands = 1 : i64, tpu.core_type = #tpu.core_type<tc>} {
    %c0 = arith.constant 0 : index
    %c0_0 = arith.constant 0 : index
    %0 = vector.load %arg0[%c0, %c0_0] : memref<64x1xi32, #tpu.memory_space<vmem>>, vector<64x1xi32>
    %1 = tpu.iota {dimensions = array<i32: 1>} : vector<64x128xi32>
    %2 = vector.broadcast %0 : vector<64x1xi32> to vector<64x128xi32>
    %3 = arith.cmpi eq, %1, %2 : vector<64x128xi32>
    %4 = arith.extui %3 : vector<64x128xi1> to vector<64x128xi32>
    %5 = arith.sitofp %4 : vector<64x128xi32> to vector<64x128xf32>
    %c0_1 = arith.constant 0 : index
    %c0_2 = arith.constant 0 : index
    %6 = vector.load %arg1[%c0_1, %c0_2] : memref<128x128xf32, #tpu.memory_space<vmem>>, vector<128x128xf32>
    %cst = arith.constant dense<0.000000e+00> : vector<64x128xf32>
    %7 = tpu.matmul %5, %6, %cst {dimension_numbers = #tpu.dot_dimension_numbers<[1], [0], [0], [1], [0, 0, 1, 1], [], []>} : vector<64x128xf32>, vector<128x128xf32>, vector<64x128xf32> -> vector<64x128xf32>
    %c0_3 = arith.constant 0 : index
    %c0_4 = arith.constant 0 : index
    %8 = vector.load %arg6[%c0_3, %c0_4] : memref<64x128xf32, #tpu.memory_space<vmem>>, vector<64x128xf32>
    tpu.vector_store %arg6[%c0_3, %c0_4], %7 {strides = array<i32>} : memref<64x128xf32, #tpu.memory_space<vmem>>, vector<64x128xf32>,
    %c0_5 = arith.constant 0 : index
    %c0_6 = arith.constant 0 : index
    %9 = vector.load %arg2[%c0_5, %c0_6] : memref<32x128xf32, #tpu.memory_space<vmem>>, vector<32x128xf32>
    %10 = tpu.iota {dimensions = array<i32: 0>} : vector<8x32xi32>
    %cst_7 = arith.constant 0.000000e+00 : f32
    %11 = vector.broadcast %cst_7 : f32 to vector<8x32xf32>
    %cst_8 = arith.constant 0.000000e+00 : f32
    %12 = vector.broadcast %cst_8 : f32 to vector<8x32xf32>
    %cst_9 = arith.constant 0.000000e+00 : f32
    %13 = vector.broadcast %cst_9 : f32 to vector<8x32xf32>
    %c0_i32 = arith.constant 0 : i32
    %c8_i32 = arith.constant 8 : i32
    %14 = arith.muli %c0_i32, %c8_i32 : i32
    %15 = tpu.assume_multiple %14, 8 : i32
    %16 = arith.index_cast %15 : i32 to index
    %c0_10 = arith.constant 0 : index
    %17 = vector.load %arg6[%16, %c0_10] : memref<64x128xf32, #tpu.memory_space<vmem>>, vector<8x128xf32>
    %cst_11 = arith.constant dense<0.000000e+00> : vector<8x128xf32>
    %18 = tpu.matmul %11, %9, %cst_11 {dimension_numbers = #tpu.dot_dimension_numbers<[1], [0], [0], [1], [0, 0, 1, 1], [], []>} : vector<8x32xf32>, vector<32x128xf32>, vector<8x128xf32> -> vector<8x128xf32>
    %19 = arith.addf %17, %18 : vector<8x128xf32>
    %20 = vector.extract_strided_slice %19 {offsets = [0, 0], sizes = [8, 32], strides = [1, 1]} : vector<8x128xf32> to vector<8x32xf32>
    %21 = arith.negf %20 : vector<8x32xf32>
    %22 = math.exp %21 : vector<8x32xf32>
    %cst_12 = arith.constant 1.000000e+00 : f32
    %23 = vector.broadcast %cst_12 : f32 to vector<8x32xf32>
    %24 = arith.addf %23, %22 : vector<8x32xf32>
    %25 = arith.divf %23, %24 : vector<8x32xf32>
    %26 = vector.extract_strided_slice %19 {offsets = [0, 32], sizes = [8, 32], strides = [1, 1]} : vector<8x128xf32> to vector<8x32xf32>
    %27 = arith.negf %26 : vector<8x32xf32>
    %28 = math.exp %27 : vector<8x32xf32>
    %cst_13 = arith.constant 1.000000e+00 : f32
    %29 = vector.broadcast %cst_13 : f32 to vector<8x32xf32>
    %30 = arith.addf %29, %28 : vector<8x32xf32>
    %31 = arith.divf %29, %30 : vector<8x32xf32>
    %32 = vector.extract_strided_slice %19 {offsets = [0, 64], sizes = [8, 32], strides = [1, 1]} : vector<8x128xf32> to vector<8x32xf32>
    %33 = math.tanh %32 : vector<8x32xf32>
    %34 = vector.extract_strided_slice %19 {offsets = [0, 96], sizes = [8, 32], strides = [1, 1]} : vector<8x128xf32> to vector<8x32xf32>
    %35 = arith.negf %34 : vector<8x32xf32>
    %36 = math.exp %35 : vector<8x32xf32>
    %cst_14 = arith.constant 1.000000e+00 : f32
    %37 = vector.broadcast %cst_14 : f32 to vector<8x32xf32>
    %38 = arith.addf %37, %36 : vector<8x32xf32>
    %39 = arith.divf %37, %38 : vector<8x32xf32>
    %40 = arith.mulf %31, %12 : vector<8x32xf32>
    %41 = arith.mulf %25, %33 : vector<8x32xf32>
    %42 = arith.addf %40, %41 : vector<8x32xf32>
    %43 = math.tanh %42 : vector<8x32xf32>
    %44 = arith.mulf %39, %43 : vector<8x32xf32>
    %45 = vector.extract_strided_slice %44 {offsets = [3, 0], sizes = [1, 32], strides = [1, 1]} : vector<8x32xf32> to vector<1x32xf32>
    %46 = vector.broadcast %c0_i32 : i32 to vector<8x32xi32>
    %47 = arith.cmpi eq, %10, %46 : vector<8x32xi32>
    %48 = vector.shape_cast %45 : vector<1x32xf32> to vector<1x32xf32>
    %49 = vector.broadcast %48 : vector<1x32xf32> to vector<8x32xf32>
    %50 = arith.select %47, %49, %13 : vector<8x32xi1>, vector<8x32xf32>
    %c1_i32 = arith.constant 1 : i32
    %c8_i32_15 = arith.constant 8 : i32
    %51 = arith.muli %c1_i32, %c8_i32_15 : i32
    %52 = tpu.assume_multiple %51, 8 : i32
    %53 = arith.index_cast %52 : i32 to index
    %c0_16 = arith.constant 0 : index
    %54 = vector.load %arg6[%53, %c0_16] : memref<64x128xf32, #tpu.memory_space<vmem>>, vector<8x128xf32>
    %cst_17 = arith.constant dense<0.000000e+00> : vector<8x128xf32>
    %55 = tpu.matmul %44, %9, %cst_17 {dimension_numbers = #tpu.dot_dimension_numbers<[1], [0], [0], [1], [0, 0, 1, 1], [], []>} : vector<8x32xf32>, vector<32x128xf32>, vector<8x128xf32> -> vector<8x128xf32>
    %56 = arith.addf %54, %55 : vector<8x128xf32>
    %57 = vector.extract_strided_slice %56 {offsets = [0, 0], sizes = [8, 32], strides = [1, 1]} : vector<8x128xf32> to vector<8x32xf32>
    %58 = arith.negf %57 : vector<8x32xf32>
    %59 = math.exp %58 : vector<8x32xf32>
    %cst_18 = arith.constant 1.000000e+00 : f32
    %60 = vector.broadcast %cst_18 : f32 to vector<8x32xf32>
    %61 = arith.addf %60, %59 : vector<8x32xf32>
    %62 = arith.divf %60, %61 : vector<8x32xf32>
    %63 = vector.extract_strided_slice %56 {offsets = [0, 32], sizes = [8, 32], strides = [1, 1]} : vector<8x128xf32> to vector<8x32xf32>
    %64 = arith.negf %63 : vector<8x32xf32>
    %65 = math.exp %64 : vector<8x32xf32>
    %cst_19 = arith.constant 1.000000e+00 : f32
    %66 = vector.broadcast %cst_19 : f32 to vector<8x32xf32>
    %67 = arith.addf %66, %65 : vector<8x32xf32>
    %68 = arith.divf %66, %67 : vector<8x32xf32>
    %69 = vector.extract_strided_slice %56 {offsets = [0, 64], sizes = [8, 32], strides = [1, 1]} : vector<8x128xf32> to vector<8x32xf32>
    %70 = math.tanh %69 : vector<8x32xf32>
    %71 = vector.extract_strided_slice %56 {offsets = [0, 96], sizes = [8, 32], strides = [1, 1]} : vector<8x128xf32> to vector<8x32xf32>
    %72 = arith.negf %71 : vector<8x32xf32>
    %73 = math.exp %72 : vector<8x32xf32>
    %cst_20 = arith.constant 1.000000e+00 : f32
    %74 = vector.broadcast %cst_20 : f32 to vector<8x32xf32>
    %75 = arith.addf %74, %73 : vector<8x32xf32>
    %76 = arith.divf %74, %75 : vector<8x32xf32>
    %77 = arith.mulf %68, %42 : vector<8x32xf32>
    %78 = arith.mulf %62, %70 : vector<8x32xf32>
    %79 = arith.addf %77, %78 : vector<8x32xf32>
    %80 = math.tanh %79 : vector<8x32xf32>
    %81 = arith.mulf %76, %80 : vector<8x32xf32>
    %82 = vector.extract_strided_slice %81 {offsets = [3, 0], sizes = [1, 32], strides = [1, 1]} : vector<8x32xf32> to vector<1x32xf32>
    %83 = vector.broadcast %c1_i32 : i32 to vector<8x32xi32>
    %84 = arith.cmpi eq, %10, %83 : vector<8x32xi32>
    %85 = vector.shape_cast %82 : vector<1x32xf32> to vector<1x32xf32>
    %86 = vector.broadcast %85 : vector<1x32xf32> to vector<8x32xf32>
    %87 = arith.select %84, %86, %50 : vector<8x32xi1>, vector<8x32xf32>
    %c2_i32 = arith.constant 2 : i32
    %c8_i32_21 = arith.constant 8 : i32
    %88 = arith.muli %c2_i32, %c8_i32_21 : i32
    %89 = tpu.assume_multiple %88, 8 : i32
    %90 = arith.index_cast %89 : i32 to index
    %c0_22 = arith.constant 0 : index
    %91 = vector.load %arg6[%90, %c0_22] : memref<64x128xf32, #tpu.memory_space<vmem>>, vector<8x128xf32>
    %cst_23 = arith.constant dense<0.000000e+00> : vector<8x128xf32>
    %92 = tpu.matmul %81, %9, %cst_23 {dimension_numbers = #tpu.dot_dimension_numbers<[1], [0], [0], [1], [0, 0, 1, 1], [], []>} : vector<8x32xf32>, vector<32x128xf32>, vector<8x128xf32> -> vector<8x128xf32>
    %93 = arith.addf %91, %92 : vector<8x128xf32>
    %94 = vector.extract_strided_slice %93 {offsets = [0, 0], sizes = [8, 32], strides = [1, 1]} : vector<8x128xf32> to vector<8x32xf32>
    %95 = arith.negf %94 : vector<8x32xf32>
    %96 = math.exp %95 : vector<8x32xf32>
    %cst_24 = arith.constant 1.000000e+00 : f32
    %97 = vector.broadcast %cst_24 : f32 to vector<8x32xf32>
    %98 = arith.addf %97, %96 : vector<8x32xf32>
    %99 = arith.divf %97, %98 : vector<8x32xf32>
    %100 = vector.extract_strided_slice %93 {offsets = [0, 32], sizes = [8, 32], strides = [1, 1]} : vector<8x128xf32> to vector<8x32xf32>
    %101 = arith.negf %100 : vector<8x32xf32>
    %102 = math.exp %101 : vector<8x32xf32>
    %cst_25 = arith.constant 1.000000e+00 : f32
    %103 = vector.broadcast %cst_25 : f32 to vector<8x32xf32>
    %104 = arith.addf %103, %102 : vector<8x32xf32>
    %105 = arith.divf %103, %104 : vector<8x32xf32>
    %106 = vector.extract_strided_slice %93 {offsets = [0, 64], sizes = [8, 32], strides = [1, 1]} : vector<8x128xf32> to vector<8x32xf32>
    %107 = math.tanh %106 : vector<8x32xf32>
    %108 = vector.extract_strided_slice %93 {offsets = [0, 96], sizes = [8, 32], strides = [1, 1]} : vector<8x128xf32> to vector<8x32xf32>
    %109 = arith.negf %108 : vector<8x32xf32>
    %110 = math.exp %109 : vector<8x32xf32>
    %cst_26 = arith.constant 1.000000e+00 : f32
    %111 = vector.broadcast %cst_26 : f32 to vector<8x32xf32>
    %112 = arith.addf %111, %110 : vector<8x32xf32>
    %113 = arith.divf %111, %112 : vector<8x32xf32>
    %114 = arith.mulf %105, %79 : vector<8x32xf32>
    %115 = arith.mulf %99, %107 : vector<8x32xf32>
    %116 = arith.addf %114, %115 : vector<8x32xf32>
    %117 = math.tanh %116 : vector<8x32xf32>
    %118 = arith.mulf %113, %117 : vector<8x32xf32>
    %119 = vector.extract_strided_slice %118 {offsets = [3, 0], sizes = [1, 32], strides = [1, 1]} : vector<8x32xf32> to vector<1x32xf32>
    %120 = vector.broadcast %c2_i32 : i32 to vector<8x32xi32>
    %121 = arith.cmpi eq, %10, %120 : vector<8x32xi32>
    %122 = vector.shape_cast %119 : vector<1x32xf32> to vector<1x32xf32>
    %123 = vector.broadcast %122 : vector<1x32xf32> to vector<8x32xf32>
    %124 = arith.select %121, %123, %87 : vector<8x32xi1>, vector<8x32xf32>
    %c3_i32 = arith.constant 3 : i32
    %c8_i32_27 = arith.constant 8 : i32
    %125 = arith.muli %c3_i32, %c8_i32_27 : i32
    %126 = tpu.assume_multiple %125, 8 : i32
    %127 = arith.index_cast %126 : i32 to index
    %c0_28 = arith.constant 0 : index
    %128 = vector.load %arg6[%127, %c0_28] : memref<64x128xf32, #tpu.memory_space<vmem>>, vector<8x128xf32>
    %cst_29 = arith.constant dense<0.000000e+00> : vector<8x128xf32>
    %129 = tpu.matmul %118, %9, %cst_29 {dimension_numbers = #tpu.dot_dimension_numbers<[1], [0], [0], [1], [0, 0, 1, 1], [], []>} : vector<8x32xf32>, vector<32x128xf32>, vector<8x128xf32> -> vector<8x128xf32>
    %130 = arith.addf %128, %129 : vector<8x128xf32>
    %131 = vector.extract_strided_slice %130 {offsets = [0, 0], sizes = [8, 32], strides = [1, 1]} : vector<8x128xf32> to vector<8x32xf32>
    %132 = arith.negf %131 : vector<8x32xf32>
    %133 = math.exp %132 : vector<8x32xf32>
    %cst_30 = arith.constant 1.000000e+00 : f32
    %134 = vector.broadcast %cst_30 : f32 to vector<8x32xf32>
    %135 = arith.addf %134, %133 : vector<8x32xf32>
    %136 = arith.divf %134, %135 : vector<8x32xf32>
    %137 = vector.extract_strided_slice %130 {offsets = [0, 32], sizes = [8, 32], strides = [1, 1]} : vector<8x128xf32> to vector<8x32xf32>
    %138 = arith.negf %137 : vector<8x32xf32>
    %139 = math.exp %138 : vector<8x32xf32>
    %cst_31 = arith.constant 1.000000e+00 : f32
    %140 = vector.broadcast %cst_31 : f32 to vector<8x32xf32>
    %141 = arith.addf %140, %139 : vector<8x32xf32>
    %142 = arith.divf %140, %141 : vector<8x32xf32>
    %143 = vector.extract_strided_slice %130 {offsets = [0, 64], sizes = [8, 32], strides = [1, 1]} : vector<8x128xf32> to vector<8x32xf32>
    %144 = math.tanh %143 : vector<8x32xf32>
    %145 = vector.extract_strided_slice %130 {offsets = [0, 96], sizes = [8, 32], strides = [1, 1]} : vector<8x128xf32> to vector<8x32xf32>
    %146 = arith.negf %145 : vector<8x32xf32>
    %147 = math.exp %146 : vector<8x32xf32>
    %cst_32 = arith.constant 1.000000e+00 : f32
    %148 = vector.broadcast %cst_32 : f32 to vector<8x32xf32>
    %149 = arith.addf %148, %147 : vector<8x32xf32>
    %150 = arith.divf %148, %149 : vector<8x32xf32>
    %151 = arith.mulf %142, %116 : vector<8x32xf32>
    %152 = arith.mulf %136, %144 : vector<8x32xf32>
    %153 = arith.addf %151, %152 : vector<8x32xf32>
    %154 = math.tanh %153 : vector<8x32xf32>
    %155 = arith.mulf %150, %154 : vector<8x32xf32>
    %156 = vector.extract_strided_slice %155 {offsets = [3, 0], sizes = [1, 32], strides = [1, 1]} : vector<8x32xf32> to vector<1x32xf32>
    %157 = vector.broadcast %c3_i32 : i32 to vector<8x32xi32>
    %158 = arith.cmpi eq, %10, %157 : vector<8x32xi32>
    %159 = vector.shape_cast %156 : vector<1x32xf32> to vector<1x32xf32>
    %160 = vector.broadcast %159 : vector<1x32xf32> to vector<8x32xf32>
    %161 = arith.select %158, %160, %124 : vector<8x32xi1>, vector<8x32xf32>
    %c4_i32 = arith.constant 4 : i32
    %c8_i32_33 = arith.constant 8 : i32
    %162 = arith.muli %c4_i32, %c8_i32_33 : i32
    %163 = tpu.assume_multiple %162, 8 : i32
    %164 = arith.index_cast %163 : i32 to index
    %c0_34 = arith.constant 0 : index
    %165 = vector.load %arg6[%164, %c0_34] : memref<64x128xf32, #tpu.memory_space<vmem>>, vector<8x128xf32>
    %cst_35 = arith.constant dense<0.000000e+00> : vector<8x128xf32>
    %166 = tpu.matmul %155, %9, %cst_35 {dimension_numbers = #tpu.dot_dimension_numbers<[1], [0], [0], [1], [0, 0, 1, 1], [], []>} : vector<8x32xf32>, vector<32x128xf32>, vector<8x128xf32> -> vector<8x128xf32>
    %167 = arith.addf %165, %166 : vector<8x128xf32>
    %168 = vector.extract_strided_slice %167 {offsets = [0, 0], sizes = [8, 32], strides = [1, 1]} : vector<8x128xf32> to vector<8x32xf32>
    %169 = arith.negf %168 : vector<8x32xf32>
    %170 = math.exp %169 : vector<8x32xf32>
    %cst_36 = arith.constant 1.000000e+00 : f32
    %171 = vector.broadcast %cst_36 : f32 to vector<8x32xf32>
    %172 = arith.addf %171, %170 : vector<8x32xf32>
    %173 = arith.divf %171, %172 : vector<8x32xf32>
    %174 = vector.extract_strided_slice %167 {offsets = [0, 32], sizes = [8, 32], strides = [1, 1]} : vector<8x128xf32> to vector<8x32xf32>
    %175 = arith.negf %174 : vector<8x32xf32>
    %176 = math.exp %175 : vector<8x32xf32>
    %cst_37 = arith.constant 1.000000e+00 : f32
    %177 = vector.broadcast %cst_37 : f32 to vector<8x32xf32>
    %178 = arith.addf %177, %176 : vector<8x32xf32>
    %179 = arith.divf %177, %178 : vector<8x32xf32>
    %180 = vector.extract_strided_slice %167 {offsets = [0, 64], sizes = [8, 32], strides = [1, 1]} : vector<8x128xf32> to vector<8x32xf32>
    %181 = math.tanh %180 : vector<8x32xf32>
    %182 = vector.extract_strided_slice %167 {offsets = [0, 96], sizes = [8, 32], strides = [1, 1]} : vector<8x128xf32> to vector<8x32xf32>
    %183 = arith.negf %182 : vector<8x32xf32>
    %184 = math.exp %183 : vector<8x32xf32>
    %cst_38 = arith.constant 1.000000e+00 : f32
    %185 = vector.broadcast %cst_38 : f32 to vector<8x32xf32>
    %186 = arith.addf %185, %184 : vector<8x32xf32>
    %187 = arith.divf %185, %186 : vector<8x32xf32>
    %188 = arith.mulf %179, %153 : vector<8x32xf32>
    %189 = arith.mulf %173, %181 : vector<8x32xf32>
    %190 = arith.addf %188, %189 : vector<8x32xf32>
    %191 = math.tanh %190 : vector<8x32xf32>
    %192 = arith.mulf %187, %191 : vector<8x32xf32>
    %193 = vector.extract_strided_slice %192 {offsets = [3, 0], sizes = [1, 32], strides = [1, 1]} : vector<8x32xf32> to vector<1x32xf32>
    %194 = vector.broadcast %c4_i32 : i32 to vector<8x32xi32>
    %195 = arith.cmpi eq, %10, %194 : vector<8x32xi32>
    %196 = vector.shape_cast %193 : vector<1x32xf32> to vector<1x32xf32>
    %197 = vector.broadcast %196 : vector<1x32xf32> to vector<8x32xf32>
    %198 = arith.select %195, %197, %161 : vector<8x32xi1>, vector<8x32xf32>
    %c5_i32 = arith.constant 5 : i32
    %c8_i32_39 = arith.constant 8 : i32
    %199 = arith.muli %c5_i32, %c8_i32_39 : i32
    %200 = tpu.assume_multiple %199, 8 : i32
    %201 = arith.index_cast %200 : i32 to index
    %c0_40 = arith.constant 0 : index
    %202 = vector.load %arg6[%201, %c0_40] : memref<64x128xf32, #tpu.memory_space<vmem>>, vector<8x128xf32>
    %cst_41 = arith.constant dense<0.000000e+00> : vector<8x128xf32>
    %203 = tpu.matmul %192, %9, %cst_41 {dimension_numbers = #tpu.dot_dimension_numbers<[1], [0], [0], [1], [0, 0, 1, 1], [], []>} : vector<8x32xf32>, vector<32x128xf32>, vector<8x128xf32> -> vector<8x128xf32>
    %204 = arith.addf %202, %203 : vector<8x128xf32>
    %205 = vector.extract_strided_slice %204 {offsets = [0, 0], sizes = [8, 32], strides = [1, 1]} : vector<8x128xf32> to vector<8x32xf32>
    %206 = arith.negf %205 : vector<8x32xf32>
    %207 = math.exp %206 : vector<8x32xf32>
    %cst_42 = arith.constant 1.000000e+00 : f32
    %208 = vector.broadcast %cst_42 : f32 to vector<8x32xf32>
    %209 = arith.addf %208, %207 : vector<8x32xf32>
    %210 = arith.divf %208, %209 : vector<8x32xf32>
    %211 = vector.extract_strided_slice %204 {offsets = [0, 32], sizes = [8, 32], strides = [1, 1]} : vector<8x128xf32> to vector<8x32xf32>
    %212 = arith.negf %211 : vector<8x32xf32>
    %213 = math.exp %212 : vector<8x32xf32>
    %cst_43 = arith.constant 1.000000e+00 : f32
    %214 = vector.broadcast %cst_43 : f32 to vector<8x32xf32>
    %215 = arith.addf %214, %213 : vector<8x32xf32>
    %216 = arith.divf %214, %215 : vector<8x32xf32>
    %217 = vector.extract_strided_slice %204 {offsets = [0, 64], sizes = [8, 32], strides = [1, 1]} : vector<8x128xf32> to vector<8x32xf32>
    %218 = math.tanh %217 : vector<8x32xf32>
    %219 = vector.extract_strided_slice %204 {offsets = [0, 96], sizes = [8, 32], strides = [1, 1]} : vector<8x128xf32> to vector<8x32xf32>
    %220 = arith.negf %219 : vector<8x32xf32>
    %221 = math.exp %220 : vector<8x32xf32>
    %cst_44 = arith.constant 1.000000e+00 : f32
    %222 = vector.broadcast %cst_44 : f32 to vector<8x32xf32>
    %223 = arith.addf %222, %221 : vector<8x32xf32>
    %224 = arith.divf %222, %223 : vector<8x32xf32>
    %225 = arith.mulf %216, %190 : vector<8x32xf32>
    %226 = arith.mulf %210, %218 : vector<8x32xf32>
    %227 = arith.addf %225, %226 : vector<8x32xf32>
    %228 = math.tanh %227 : vector<8x32xf32>
    %229 = arith.mulf %224, %228 : vector<8x32xf32>
    %230 = vector.extract_strided_slice %229 {offsets = [3, 0], sizes = [1, 32], strides = [1, 1]} : vector<8x32xf32> to vector<1x32xf32>
    %231 = vector.broadcast %c5_i32 : i32 to vector<8x32xi32>
    %232 = arith.cmpi eq, %10, %231 : vector<8x32xi32>
    %233 = vector.shape_cast %230 : vector<1x32xf32> to vector<1x32xf32>
    %234 = vector.broadcast %233 : vector<1x32xf32> to vector<8x32xf32>
    %235 = arith.select %232, %234, %198 : vector<8x32xi1>, vector<8x32xf32>
    %c6_i32 = arith.constant 6 : i32
    %c8_i32_45 = arith.constant 8 : i32
    %236 = arith.muli %c6_i32, %c8_i32_45 : i32
    %237 = tpu.assume_multiple %236, 8 : i32
    %238 = arith.index_cast %237 : i32 to index
    %c0_46 = arith.constant 0 : index
    %239 = vector.load %arg6[%238, %c0_46] : memref<64x128xf32, #tpu.memory_space<vmem>>, vector<8x128xf32>
    %cst_47 = arith.constant dense<0.000000e+00> : vector<8x128xf32>
    %240 = tpu.matmul %229, %9, %cst_47 {dimension_numbers = #tpu.dot_dimension_numbers<[1], [0], [0], [1], [0, 0, 1, 1], [], []>} : vector<8x32xf32>, vector<32x128xf32>, vector<8x128xf32> -> vector<8x128xf32>
    %241 = arith.addf %239, %240 : vector<8x128xf32>
    %242 = vector.extract_strided_slice %241 {offsets = [0, 0], sizes = [8, 32], strides = [1, 1]} : vector<8x128xf32> to vector<8x32xf32>
    %243 = arith.negf %242 : vector<8x32xf32>
    %244 = math.exp %243 : vector<8x32xf32>
    %cst_48 = arith.constant 1.000000e+00 : f32
    %245 = vector.broadcast %cst_48 : f32 to vector<8x32xf32>
    %246 = arith.addf %245, %244 : vector<8x32xf32>
    %247 = arith.divf %245, %246 : vector<8x32xf32>
    %248 = vector.extract_strided_slice %241 {offsets = [0, 32], sizes = [8, 32], strides = [1, 1]} : vector<8x128xf32> to vector<8x32xf32>
    %249 = arith.negf %248 : vector<8x32xf32>
    %250 = math.exp %249 : vector<8x32xf32>
    %cst_49 = arith.constant 1.000000e+00 : f32
    %251 = vector.broadcast %cst_49 : f32 to vector<8x32xf32>
    %252 = arith.addf %251, %250 : vector<8x32xf32>
    %253 = arith.divf %251, %252 : vector<8x32xf32>
    %254 = vector.extract_strided_slice %241 {offsets = [0, 64], sizes = [8, 32], strides = [1, 1]} : vector<8x128xf32> to vector<8x32xf32>
    %255 = math.tanh %254 : vector<8x32xf32>
    %256 = vector.extract_strided_slice %241 {offsets = [0, 96], sizes = [8, 32], strides = [1, 1]} : vector<8x128xf32> to vector<8x32xf32>
    %257 = arith.negf %256 : vector<8x32xf32>
    %258 = math.exp %257 : vector<8x32xf32>
    %cst_50 = arith.constant 1.000000e+00 : f32
    %259 = vector.broadcast %cst_50 : f32 to vector<8x32xf32>
    %260 = arith.addf %259, %258 : vector<8x32xf32>
    %261 = arith.divf %259, %260 : vector<8x32xf32>
    %262 = arith.mulf %253, %227 : vector<8x32xf32>
    %263 = arith.mulf %247, %255 : vector<8x32xf32>
    %264 = arith.addf %262, %263 : vector<8x32xf32>
    %265 = math.tanh %264 : vector<8x32xf32>
    %266 = arith.mulf %261, %265 : vector<8x32xf32>
    %267 = vector.extract_strided_slice %266 {offsets = [3, 0], sizes = [1, 32], strides = [1, 1]} : vector<8x32xf32> to vector<1x32xf32>
    %268 = vector.broadcast %c6_i32 : i32 to vector<8x32xi32>
    %269 = arith.cmpi eq, %10, %268 : vector<8x32xi32>
    %270 = vector.shape_cast %267 : vector<1x32xf32> to vector<1x32xf32>
    %271 = vector.broadcast %270 : vector<1x32xf32> to vector<8x32xf32>
    %272 = arith.select %269, %271, %235 : vector<8x32xi1>, vector<8x32xf32>
    %c7_i32 = arith.constant 7 : i32
    %c8_i32_51 = arith.constant 8 : i32
    %273 = arith.muli %c7_i32, %c8_i32_51 : i32
    %274 = tpu.assume_multiple %273, 8 : i32
    %275 = arith.index_cast %274 : i32 to index
    %c0_52 = arith.constant 0 : index
    %276 = vector.load %arg6[%275, %c0_52] : memref<64x128xf32, #tpu.memory_space<vmem>>, vector<8x128xf32>
    %cst_53 = arith.constant dense<0.000000e+00> : vector<8x128xf32>
    %277 = tpu.matmul %266, %9, %cst_53 {dimension_numbers = #tpu.dot_dimension_numbers<[1], [0], [0], [1], [0, 0, 1, 1], [], []>} : vector<8x32xf32>, vector<32x128xf32>, vector<8x128xf32> -> vector<8x128xf32>
    %278 = arith.addf %276, %277 : vector<8x128xf32>
    %279 = vector.extract_strided_slice %278 {offsets = [0, 0], sizes = [8, 32], strides = [1, 1]} : vector<8x128xf32> to vector<8x32xf32>
    %280 = arith.negf %279 : vector<8x32xf32>
    %281 = math.exp %280 : vector<8x32xf32>
    %cst_54 = arith.constant 1.000000e+00 : f32
    %282 = vector.broadcast %cst_54 : f32 to vector<8x32xf32>
    %283 = arith.addf %282, %281 : vector<8x32xf32>
    %284 = arith.divf %282, %283 : vector<8x32xf32>
    %285 = vector.extract_strided_slice %278 {offsets = [0, 32], sizes = [8, 32], strides = [1, 1]} : vector<8x128xf32> to vector<8x32xf32>
    %286 = arith.negf %285 : vector<8x32xf32>
    %287 = math.exp %286 : vector<8x32xf32>
    %cst_55 = arith.constant 1.000000e+00 : f32
    %288 = vector.broadcast %cst_55 : f32 to vector<8x32xf32>
    %289 = arith.addf %288, %287 : vector<8x32xf32>
    %290 = arith.divf %288, %289 : vector<8x32xf32>
    %291 = vector.extract_strided_slice %278 {offsets = [0, 64], sizes = [8, 32], strides = [1, 1]} : vector<8x128xf32> to vector<8x32xf32>
    %292 = math.tanh %291 : vector<8x32xf32>
    %293 = vector.extract_strided_slice %278 {offsets = [0, 96], sizes = [8, 32], strides = [1, 1]} : vector<8x128xf32> to vector<8x32xf32>
    %294 = arith.negf %293 : vector<8x32xf32>
    %295 = math.exp %294 : vector<8x32xf32>
    %cst_56 = arith.constant 1.000000e+00 : f32
    %296 = vector.broadcast %cst_56 : f32 to vector<8x32xf32>
    %297 = arith.addf %296, %295 : vector<8x32xf32>
    %298 = arith.divf %296, %297 : vector<8x32xf32>
    %299 = arith.mulf %290, %264 : vector<8x32xf32>
    %300 = arith.mulf %284, %292 : vector<8x32xf32>
    %301 = arith.addf %299, %300 : vector<8x32xf32>
    %302 = math.tanh %301 : vector<8x32xf32>
    %303 = arith.mulf %298, %302 : vector<8x32xf32>
    %304 = vector.extract_strided_slice %303 {offsets = [3, 0], sizes = [1, 32], strides = [1, 1]} : vector<8x32xf32> to vector<1x32xf32>
    %305 = vector.broadcast %c7_i32 : i32 to vector<8x32xi32>
    %306 = arith.cmpi eq, %10, %305 : vector<8x32xi32>
    %307 = vector.shape_cast %304 : vector<1x32xf32> to vector<1x32xf32>
    %308 = vector.broadcast %307 : vector<1x32xf32> to vector<8x32xf32>
    %309 = arith.select %306, %308, %272 : vector<8x32xi1>, vector<8x32xf32>
    %c8_i32_57 = arith.constant 8 : i32
    %c0_58 = arith.constant 0 : index
    %c0_59 = arith.constant 0 : index
    %310 = vector.load %arg3[%c0_58, %c0_59] : memref<32x128xf32, #tpu.memory_space<vmem>>, vector<32x128xf32>
    %cst_60 = arith.constant dense<0.000000e+00> : vector<8x128xf32>
    %311 = tpu.matmul %309, %310, %cst_60 {dimension_numbers = #tpu.dot_dimension_numbers<[1], [0], [0], [1], [0, 0, 1, 1], [], []>} : vector<8x32xf32>, vector<32x128xf32>, vector<8x128xf32> -> vector<8x128xf32>
    %c0_61 = arith.constant 0 : index
    %c0_62 = arith.constant 0 : index
    %312 = vector.load %arg4[%c0_61, %c0_62] : memref<1x128xf32, #tpu.memory_space<vmem>>, vector<1x128xf32>
    %313 = vector.broadcast %312 : vector<1x128xf32> to vector<8x128xf32>
    %314 = arith.addf %311, %313 : vector<8x128xf32>
    %c0_63 = arith.constant 0 : index
    %c0_64 = arith.constant 0 : index
    %315 = vector.load %arg5[%c0_63, %c0_64] : memref<8x128xf32, #tpu.memory_space<vmem>>, vector<8x128xf32>
    tpu.vector_store %arg5[%c0_63, %c0_64], %314 {strides = array<i32>} : memref<8x128xf32, #tpu.memory_space<vmem>>, vector<8x128xf32>,
    return
  }
}

</mosaic_0001>

<llo_original>
// kernel: tpu_custom_call.1
$region0: #{tpu_custom_call.1}
  #allocation0 [shape = 'u32[]', space=smem, size = 0x4, offset = 0x4, fixed_abs, tag = 'smem constant byte address 0x4 - core index']
  #allocation1 [shape = 'u32[144,128]{1,0:T(1,128)}', space=vmem, size = 0x12000, scoped, tag = 'internal scratch']
  #allocation2 [shape = 'f32[64,128]{1,0:T(8,128)}', space=vmem, size = 0x8000, scoped, tag = 'scratch operand']
  %s0 = inlined_call_operand.vmem [shape: s32[64,1], index: 0, kind: input, shape index: {}]
  %s1 = inlined_call_operand.hbm [shape: f32[128,128], index: 1, kind: input, shape index: {}]
  %s2 = inlined_call_operand.vmem [shape: f32[32,128], index: 2, kind: input, shape index: {}]
  %s3 = inlined_call_operand.vmem [shape: f32[32,128], index: 3, kind: input, shape index: {}]
  %s4 = inlined_call_operand.vmem [shape: f32[1,128], index: 4, kind: input, shape index: {}]
  %s5 = inlined_call_operand.hbm [shape: f32[8,128], index: 5, kind: output, shape index: {}]
  %s6 = sld [smem:[#allocation0]]
  $region34: #{tpu_custom_call.1} parent=0
    _
  %s8 = ssub.s32 1, %s6
  %s9 = scalar_select 0, %s8, %s6
  $region1: #{tpu_custom_call.1} parent=0
    #allocation3 [shape = 'u8[65536]{0}', space=vmem, size = 0x10000, scoped, tag = 'input window, operand 1, single buffered']
    #allocation4 [shape = 's32[1]{0}', space=sflag, size = 0x4, scoped, tag = 'scoped memory for tpu_custom_call.1']
    #allocation5 [shape = 's32[1]{0}', space=sflag, size = 0x4, scoped, tag = 'scoped memory for tpu_custom_call.1']
    #allocation6 [shape = 'u8[4096]{0}', space=vmem, size = 0x1000, scoped, tag = 'output window, operand 0, single buffered']
    %10 = vsyncpa [#allocation4], 0
    %11 = vsyncpa [#allocation5], 0
    // Predicated region
    $region2: #{tpu_custom_call.1} parent=1 // pred_check
      _
    $region3: #{tpu_custom_call.1} parent=1 // pred_check_branch
      %13 = sbr.rel (0) target = $region5
    $region4: #{tpu_custom_call.1} parent=1 // pred_region
      _
    $region5: #{tpu_custom_call.1} parent=1 // pred_fallthru
      _
    // Predicated region
    $region6: #{tpu_custom_call.1} parent=1 // pred_check
      _
    $region7: #{tpu_custom_call.1} parent=1 // pred_check_branch
      %15 = sbr.rel (0) target = $region9
    $region8: #{tpu_custom_call.1} parent=1 // pred_region
      %s17 = ssub.s32 2048, 2048
      %18 = vsyncadd [#allocation4], %s17
      %s19 = sshll.u32 [#allocation3], 4
      %s20 = int_to_ptr.vmem [resolvable:$true] %s19
      %25 = dma.hbm_to_vmem [thread:$0]  %s1, 2048, %s20, [#allocation4], 128, 128, 8
    $region9: #{tpu_custom_call.1} parent=1 // pred_fallthru
      _
    // Predicated region
    $region10: #{tpu_custom_call.1} parent=1 // pred_check
      _
    $region11: #{tpu_custom_call.1} parent=1 // pred_check_branch
      %27 = sbr.rel (0) target = $region13
    $region12: #{tpu_custom_call.1} parent=1 // pred_region
      _
    $region13: #{tpu_custom_call.1} parent=1 // pred_fallthru
      _
    // Predicated region
    $region14: #{tpu_custom_call.1} parent=1 // pred_check
      _
    $region15: #{tpu_custom_call.1} parent=1 // pred_check_branch
      %29 = sbr.rel (0) target = $region17
    $region16: #{tpu_custom_call.1} parent=1 // pred_region
      _
    $region17: #{tpu_custom_call.1} parent=1 // pred_fallthru
      _
    // Predicated region
    $region18: #{tpu_custom_call.1} parent=1 // pred_check
      _
    $region19: #{tpu_custom_call.1} parent=1 // pred_check_branch
      %31 = sbr.rel (0) target = $region21
    $region20: #{tpu_custom_call.1} parent=1 // pred_region
      _
    $region21: #{tpu_custom_call.1} parent=1 // pred_fallthru
      _
    // Predicated region
    $region22: #{tpu_custom_call.1} parent=1 // pred_check
      _
    $region23: #{tpu_custom_call.1} parent=1 // pred_check_branch
      %33 = sbr.rel (0) target = $region25
    $region24: #{tpu_custom_call.1} parent=1 // pred_region
      %34 = dma.done [#allocation4], 2048
    $region25: #{tpu_custom_call.1} parent=1 // pred_fallthru
      _
    %v35 = vld [vmem:[%s0] sm:$0xff]
    %v36 = vld [vmem:[%s0 + $0x8] sm:$0xff]
    %v37 = vld [vmem:[%s0 + $0x10] sm:$0xff]
    %v38 = vld [vmem:[%s0 + $0x18] sm:$0xff]
    %v39 = vld [vmem:[%s0 + $0x20] sm:$0xff]
    %v40 = vld [vmem:[%s0 + $0x28] sm:$0xff]
    %v41 = vld [vmem:[%s0 + $0x30] sm:$0xff]
    %v42 = vld [vmem:[%s0 + $0x38] sm:$0xff]
    %v43 = vlaneseq
    %v44 = vand.u32 %v43, 127
    %45 = vset.pattern.permute.xlu0 0
    %46 = vperm.xlu0 %45, %v35
    %v47 = vpop.permute.xlu0 %46
    %48 = vset.pattern.permute.xlu0 0
    %49 = vperm.xlu0 %48, %v36
    %v50 = vpop.permute.xlu0 %49
    %51 = vset.pattern.permute.xlu0 0
    %52 = vperm.xlu0 %51, %v37
    %v53 = vpop.permute.xlu0 %52
    %54 = vset.pattern.permute.xlu0 0
    %55 = vperm.xlu0 %54, %v38
    %v56 = vpop.permute.xlu0 %55
    %57 = vset.pattern.permute.xlu0 0
    %58 = vperm.xlu0 %57, %v39
    %v59 = vpop.permute.xlu0 %58
    %60 = vset.pattern.permute.xlu0 0
    %61 = vperm.xlu0 %60, %v40
    %v62 = vpop.permute.xlu0 %61
    %63 = vset.pattern.permute.xlu0 0
    %64 = vperm.xlu0 %63, %v41
    %v65 = vpop.permute.xlu0 %64
    %66 = vset.pattern.permute.xlu0 0
    %67 = vperm.xlu0 %66, %v42
    %v68 = vpop.permute.xlu0 %67
    %vm69 = vcmp.eq.s32.totalorder %v44, %v47
    %vm70 = vcmp.eq.s32.totalorder %v44, %v50
    %vm71 = vcmp.eq.s32.totalorder %v44, %v53
    %vm72 = vcmp.eq.s32.totalorder %v44, %v56
    %vm73 = vcmp.eq.s32.totalorder %v44, %v59
    %vm74 = vcmp.eq.s32.totalorder %v44, %v62
    %vm75 = vcmp.eq.s32.totalorder %v44, %v65
    %vm76 = vcmp.eq.s32.totalorder %v44, %v68
    %v77 = vsel %vm69, 1, 0
    %v78 = vsel %vm70, 1, 0
    %v79 = vsel %vm71, 1, 0
    %v80 = vsel %vm72, 1, 0
    %v81 = vsel %vm73, 1, 0
    %v82 = vsel %vm74, 1, 0
    %v83 = vsel %vm75, 1, 0
    %v84 = vsel %vm76, 1, 0
    %v85 = vcvt.s32.f32 %v77
    %v86 = vcvt.s32.f32 %v78
    %v87 = vcvt.s32.f32 %v79
    %v88 = vcvt.s32.f32 %v80
    %v89 = vcvt.s32.f32 %v81
    %v90 = vcvt.s32.f32 %v82
    %v91 = vcvt.s32.f32 %v83
    %v92 = vcvt.s32.f32 %v84
    %v93 = vld [vmem:[#allocation3] sm:$0xff]
    %v94 = vld [vmem:[#allocation3 + $0x8] sm:$0xff]
    %v95 = vld [vmem:[#allocation3 + $0x10] sm:$0xff]
    %v96 = vld [vmem:[#allocation3 + $0x18] sm:$0xff]
    %v97 = vld [vmem:[#allocation3 + $0x20] sm:$0xff]
    %v98 = vld [vmem:[#allocation3 + $0x28] sm:$0xff]
    %v99 = vld [vmem:[#allocation3 + $0x30] sm:$0xff]
    %v100 = vld [vmem:[#allocation3 + $0x38] sm:$0xff]
    %v101 = vld [vmem:[#allocation3 + $0x40] sm:$0xff]
    %v102 = vld [vmem:[#allocation3 + $0x48] sm:$0xff]
    %v103 = vld [vmem:[#allocation3 + $0x50] sm:$0xff]
    %v104 = vld [vmem:[#allocation3 + $0x58] sm:$0xff]
    %v105 = vld [vmem:[#allocation3 + $0x60] sm:$0xff]
    %v106 = vld [vmem:[#allocation3 + $0x68] sm:$0xff]
    %v107 = vld [vmem:[#allocation3 + $0x70] sm:$0xff]
    %v108 = vld [vmem:[#allocation3 + $0x78] sm:$0xff]
    %109 = vmatprep.subr.mxu0 0.0
    %110 = vmatpush1.msra.mxu0 %v108
    %111 = vmatprep.subr.mxu0 0.0
    %112 = vmatpush1.msra.mxu0 %v107
    %113 = vmatprep.subr.mxu0 0.0
    %114 = vmatpush1.msra.mxu0 %v106
    %115 = vmatprep.subr.mxu0 0.0
    %116 = vmatpush1.msra.mxu0 %v105
    %117 = vmatprep.subr.mxu0 0.0
    %118 = vmatpush1.msra.mxu0 %v104
    %119 = vmatprep.subr.mxu0 0.0
    %120 = vmatpush1.msra.mxu0 %v103
    %121 = vmatprep.subr.mxu0 0.0
    %122 = vmatpush1.msra.mxu0 %v102
    %123 = vmatprep.subr.mxu0 0.0
    %124 = vmatpush1.msra.mxu0 %v101
    %125 = vmatprep.subr.mxu0 0.0
    %126 = vmatpush1.msra.mxu0 %v100
    %127 = vmatprep.subr.mxu0 0.0
    %128 = vmatpush1.msra.mxu0 %v99
    %129 = vmatprep.subr.mxu0 0.0
    %130 = vmatpush1.msra.mxu0 %v98
    %131 = vmatprep.subr.mxu0 0.0
    %132 = vmatpush1.msra.mxu0 %v97
    %133 = vmatprep.subr.mxu0 0.0
    %134 = vmatpush1.msra.mxu0 %v96
    %135 = vmatprep.subr.mxu0 0.0
    %136 = vmatpush1.msra.mxu0 %v95
    %137 = vmatprep.subr.mxu0 0.0
    %138 = vmatpush1.msra.mxu0 %v94
    %139 = vmatprep.subr.mxu0 0.0
    %140 = vmatpush1.msra.mxu0 %v93
    %141 = vmatprep.subr.mxu0 0.0
    %142 = vmatpush2.msra.mxu0 0.0
    %143 = vmatprep.subr.mxu0 0.0
    %144 = vmatpush2.msra.mxu0 0.0
    %145 = vmatprep.subr.mxu0 0.0
    %146 = vmatpush2.msra.mxu0 0.0
    %147 = vmatprep.subr.mxu0 0.0
    %148 = vmatpush2.msra.mxu0 0.0
    %149 = vmatprep.subr.mxu0 0.0
    %150 = vmatpush2.msra.mxu0 0.0
    %151 = vmatprep.subr.mxu0 0.0
    %152 = vmatpush2.msra.mxu0 0.0
    %153 = vmatprep.subr.mxu0 0.0
    %154 = vmatpush2.msra.mxu0 0.0
    %155 = vmatprep.subr.mxu0 0.0
    %156 = vmatpush2.msra.mxu0 0.0
    %157 = vmatprep.subr.mxu0 0.0
    %158 = vmatpush2.msra.mxu0 0.0
    %159 = vmatprep.subr.mxu0 0.0
    %160 = vmatpush2.msra.mxu0 0.0
    %161 = vmatprep.subr.mxu0 0.0
    %162 = vmatpush2.msra.mxu0 0.0
    %163 = vmatprep.subr.mxu0 0.0
    %164 = vmatpush2.msra.mxu0 0.0
    %165 = vmatprep.subr.mxu0 0.0
    %166 = vmatpush2.msra.mxu0 0.0
    %167 = vmatprep.subr.mxu0 0.0
    %168 = vmatpush2.msra.mxu0 0.0
    %169 = vmatprep.subr.mxu0 0.0
    %170 = vmatpush2.msra.mxu0 0.0
    %171 = vmatprep.subr.mxu0 0.0
    %172 = vmatpush2.msra.mxu0 0.0
    %173 = vmatprep.mubr.f32.mxu0 0.0
    %174 = vmatmul.mubr.f32.gmra.mxu0 %v85
    %v175 = vpop.f32.mrf.mxu0
    %v176 = vadd.f32 0.0, %v175
    %v177 = vpop.f32.mrf.mxu0
    %178 = vmatprep.mubr.f32.mxu0 0.0
    %179 = vmatmul.mubr.f32.gmra.mxu0 %v86
    %v180 = vpop.f32.mrf.mxu0
    %v181 = vadd.f32 0.0, %v180
    %v182 = vpop.f32.mrf.mxu0
    %183 = vmatprep.mubr.f32.mxu0 0.0
    %184 = vmatmul.mubr.f32.gmra.mxu0 %v87
    %v185 = vpop.f32.mrf.mxu0
    %v186 = vadd.f32 0.0, %v185
    %v187 = vpop.f32.mrf.mxu0
    %188 = vmatprep.mubr.f32.mxu0 0.0
    %189 = vmatmul.mubr.f32.gmra.mxu0 %v88
    %v190 = vpop.f32.mrf.mxu0
    %v191 = vadd.f32 0.0, %v190
    %v192 = vpop.f32.mrf.mxu0
    %193 = vmatprep.mubr.f32.mxu0 0.0
    %194 = vmatmul.mubr.f32.gmra.mxu0 %v89
    %v195 = vpop.f32.mrf.mxu0
    %v196 = vadd.f32 0.0, %v195
    %v197 = vpop.f32.mrf.mxu0
    %198 = vmatprep.mubr.f32.mxu0 0.0
    %199 = vmatmul.mubr.f32.gmra.mxu0 %v90
    %v200 = vpop.f32.mrf.mxu0
    %v201 = vadd.f32 0.0, %v200
    %v202 = vpop.f32.mrf.mxu0
    %203 = vmatprep.mubr.f32.mxu0 0.0
    %204 = vmatmul.mubr.f32.gmra.mxu0 %v91
    %v205 = vpop.f32.mrf.mxu0
    %v206 = vadd.f32 0.0, %v205
    %v207 = vpop.f32.mrf.mxu0
    %208 = vmatprep.mubr.f32.mxu0 0.0
    %209 = vmatmul.mubr.f32.gmra.mxu0 %v92
    %v210 = vpop.f32.mrf.mxu0
    %v211 = vadd.f32 0.0, %v210
    %v212 = vpop.f32.mrf.mxu0
    %213 = vdwg.mxu0
    %214 = vst [vmem:[#allocation2] sm:$0xff] %v176
    %215 = vst [vmem:[#allocation2 + $0x8] sm:$0xff] %v181
    %216 = vst [vmem:[#allocation2 + $0x10] sm:$0xff] %v186
    %217 = vst [vmem:[#allocation2 + $0x18] sm:$0xff] %v191
    %218 = vst [vmem:[#allocation2 + $0x20] sm:$0xff] %v196
    %219 = vst [vmem:[#allocation2 + $0x28] sm:$0xff] %v201
    %220 = vst [vmem:[#allocation2 + $0x30] sm:$0xff] %v206
    %221 = vst [vmem:[#allocation2 + $0x38] sm:$0xff] %v211
    %v222 = vld [vmem:[%s2] sm:$0xff]
    %v223 = vld [vmem:[%s2 + $0x8] sm:$0xff]
    %v224 = vld [vmem:[%s2 + $0x10] sm:$0xff]
    %v225 = vld [vmem:[%s2 + $0x18] sm:$0xff]
    %v226 = vlaneseq
    %v227 = vshrl.u32 %v226, 7
    %v228 = vld [vmem:[#allocation2] sm:$0xff]
    %vm229 = vcmask 261120
    %v231 = vsel %vm229, 0.0, 0
    %233 = vmatprep.subr.mxu0 0.0
    %234 = vmatpush1.msra.mxu0 0.0
    %235 = vmatprep.subr.mxu0 0.0
    %236 = vmatpush1.msra.mxu0 0.0
    %237 = vmatprep.subr.mxu0 0.0
    %238 = vmatpush1.msra.mxu0 0.0
    %239 = vmatprep.subr.mxu0 0.0
    %240 = vmatpush1.msra.mxu0 0.0
    %241 = vmatprep.subr.mxu0 0.0
    %242 = vmatpush1.msra.mxu0 0.0
    %243 = vmatprep.subr.mxu0 0.0
    %244 = vmatpush1.msra.mxu0 0.0
    %245 = vmatprep.subr.mxu0 0.0
    %246 = vmatpush1.msra.mxu0 0.0
    %247 = vmatprep.subr.mxu0 0.0
    %248 = vmatpush1.msra.mxu0 0.0
    %249 = vmatprep.subr.mxu0 0.0
    %250 = vmatpush1.msra.mxu0 0.0
    %251 = vmatprep.subr.mxu0 0.0
    %252 = vmatpush1.msra.mxu0 0.0
    %253 = vmatprep.subr.mxu0 0.0
    %254 = vmatpush1.msra.mxu0 0.0
    %255 = vmatprep.subr.mxu0 0.0
    %256 = vmatpush1.msra.mxu0 0.0
    %257 = vmatprep.subr.mxu0 0.0
    %258 = vmatpush1.msra.mxu0 %v225
    %259 = vmatprep.subr.mxu0 0.0
    %260 = vmatpush1.msra.mxu0 %v224
    %261 = vmatprep.subr.mxu0 0.0
    %262 = vmatpush1.msra.mxu0 %v223
    %263 = vmatprep.subr.mxu0 0.0
    %264 = vmatpush1.msra.mxu0 %v222
    %265 = vmatprep.subr.mxu0 0.0
    %266 = vmatpush2.msra.mxu0 0.0
    %267 = vmatprep.subr.mxu0 0.0
    %268 = vmatpush2.msra.mxu0 0.0
    %269 = vmatprep.subr.mxu0 0.0
    %270 = vmatpush2.msra.mxu0 0.0
    %271 = vmatprep.subr.mxu0 0.0
    %272 = vmatpush2.msra.mxu0 0.0
    %273 = vmatprep.subr.mxu0 0.0
    %274 = vmatpush2.msra.mxu0 0.0
    %275 = vmatprep.subr.mxu0 0.0
    %276 = vmatpush2.msra.mxu0 0.0
    %277 = vmatprep.subr.mxu0 0.0
    %278 = vmatpush2.msra.mxu0 0.0
    %279 = vmatprep.subr.mxu0 0.0
    %280 = vmatpush2.msra.mxu0 0.0
    %281 = vmatprep.subr.mxu0 0.0
    %282 = vmatpush2.msra.mxu0 0.0
    %283 = vmatprep.subr.mxu0 0.0
    %284 = vmatpush2.msra.mxu0 0.0
    %285 = vmatprep.subr.mxu0 0.0
    %286 = vmatpush2.msra.mxu0 0.0
    %287 = vmatprep.subr.mxu0 0.0
    %288 = vmatpush2.msra.mxu0 0.0
    %289 = vmatprep.subr.mxu0 0.0
    %290 = vmatpush2.msra.mxu0 0.0
    %291 = vmatprep.subr.mxu0 0.0
    %292 = vmatpush2.msra.mxu0 0.0
    %293 = vmatprep.subr.mxu0 0.0
    %294 = vmatpush2.msra.mxu0 0.0
    %295 = vmatprep.subr.mxu0 0.0
    %296 = vmatpush2.msra.mxu0 0.0
    %297 = vmatprep.mubr.f32.mxu0 0.0
    %298 = vmatmul.mubr.f32.gmra.mxu0 %v231
    %v299 = vpop.f32.mrf.mxu0
    %v300 = vadd.f32 0.0, %v299
    %v301 = vpop.f32.mrf.mxu0
    %302 = vdwg.mxu0
    %v303 = vadd.f32 %v228, %v300
    %v304 = vxor.u32 %v303, 2147483648
    %v305 = vmul.f32 %v304, 1.442695
    %v306 = vpow.pop %v305
    %v307 = vadd.f32 %v306, 1.0
    %v308 = vrcp.pop %v307
    %v309 = vmul.f32 1.0, %v308
    %v310 = vtanh.pop %v303
    %v311 = vmul.f32 %v309, 0.0
    %313 = vrot.lane.b32.xlu0 %v310, 64
    %v314 = vpop.permute.xlu0 %313
    %v316 = vmul.f32 %v309, %v314
    %318 = vrot.lane.b32.xlu0 %v316, 32
    %v319 = vpop.permute.xlu0 %318
    %v321 = vadd.f32 %v311, %v319
    %v322 = vtanh.pop %v321
    %324 = vrot.lane.b32.xlu0 %v322, 64
    %v325 = vpop.permute.xlu0 %324
    %v327 = vmul.f32 %v309, %v325
    %vm328 = vcmp.eq.s32.totalorder %v227, 0
    %v329 = vlaneseq
    %v330 = vshrl.u32 %v329, 7
    %v331 = vsub.s32 3, %v330
    %v332 = vrot.slane %v327, %v331
    %v333 = vsel %vm328, %v332, 0.0
    %s334 = scalar_lea.vmem [#allocation2], 8
    %v335 = vld [vmem:[%s334] sm:$0xff]
    %337 = vrot.lane.b32.xlu0 %v327, 32
    %v338 = vpop.permute.xlu0 %337
    %v339 = vsel %vm229, %v338, 0
    %341 = vmatprep.subr.mxu0 0.0
    %342 = vmatpush1.msra.mxu0 0.0
    %343 = vmatprep.subr.mxu0 0.0
    %344 = vmatpush1.msra.mxu0 0.0
    %345 = vmatprep.subr.mxu0 0.0
    %346 = vmatpush1.msra.mxu0 0.0
    %347 = vmatprep.subr.mxu0 0.0
    %348 = vmatpush1.msra.mxu0 0.0
    %349 = vmatprep.subr.mxu0 0.0
    %350 = vmatpush1.msra.mxu0 0.0
    %351 = vmatprep.subr.mxu0 0.0
    %352 = vmatpush1.msra.mxu0 0.0
    %353 = vmatprep.subr.mxu0 0.0
    %354 = vmatpush1.msra.mxu0 0.0
    %355 = vmatprep.subr.mxu0 0.0
    %356 = vmatpush1.msra.mxu0 0.0
    %357 = vmatprep.subr.mxu0 0.0
    %358 = vmatpush1.msra.mxu0 0.0
    %359 = vmatprep.subr.mxu0 0.0
    %360 = vmatpush1.msra.mxu0 0.0
    %361 = vmatprep.subr.mxu0 0.0
    %362 = vmatpush1.msra.mxu0 0.0
    %363 = vmatprep.subr.mxu0 0.0
    %364 = vmatpush1.msra.mxu0 0.0
    %365 = vmatprep.subr.mxu0 0.0
    %366 = vmatpush1.msra.mxu0 %v225
    %367 = vmatprep.subr.mxu0 0.0
    %368 = vmatpush1.msra.mxu0 %v224
    %369 = vmatprep.subr.mxu0 0.0
    %370 = vmatpush1.msra.mxu0 %v223
    %371 = vmatprep.subr.mxu0 0.0
    %372 = vmatpush1.msra.mxu0 %v222
    %373 = vmatprep.subr.mxu0 0.0
    %374 = vmatpush2.msra.mxu0 0.0
    %375 = vmatprep.subr.mxu0 0.0
    %376 = vmatpush2.msra.mxu0 0.0
    %377 = vmatprep.subr.mxu0 0.0
    %378 = vmatpush2.msra.mxu0 0.0
    %379 = vmatprep.subr.mxu0 0.0
    %380 = vmatpush2.msra.mxu0 0.0
    %381 = vmatprep.subr.mxu0 0.0
    %382 = vmatpush2.msra.mxu0 0.0
    %383 = vmatprep.subr.mxu0 0.0
    %384 = vmatpush2.msra.mxu0 0.0
    %385 = vmatprep.subr.mxu0 0.0
    %386 = vmatpush2.msra.mxu0 0.0
    %387 = vmatprep.subr.mxu0 0.0
    %388 = vmatpush2.msra.mxu0 0.0
    %389 = vmatprep.subr.mxu0 0.0
    %390 = vmatpush2.msra.mxu0 0.0
    %391 = vmatprep.subr.mxu0 0.0
    %392 = vmatpush2.msra.mxu0 0.0
    %393 = vmatprep.subr.mxu0 0.0
    %394 = vmatpush2.msra.mxu0 0.0
    %395 = vmatprep.subr.mxu0 0.0
    %396 = vmatpush2.msra.mxu0 0.0
    %397 = vmatprep.subr.mxu0 0.0
    %398 = vmatpush2.msra.mxu0 0.0
    %399 = vmatprep.subr.mxu0 0.0
    %400 = vmatpush2.msra.mxu0 0.0
    %401 = vmatprep.subr.mxu0 0.0
    %402 = vmatpush2.msra.mxu0 0.0
    %403 = vmatprep.subr.mxu0 0.0
    %404 = vmatpush2.msra.mxu0 0.0
    %405 = vmatprep.mubr.f32.mxu0 0.0
    %406 = vmatmul.mubr.f32.gmra.mxu0 %v339
    %v407 = vpop.f32.mrf.mxu0
    %v408 = vadd.f32 0.0, %v407
    %v409 = vpop.f32.mrf.mxu0
    %410 = vdwg.mxu0
    %v411 = vadd.f32 %v335, %v408
    %v412 = vxor.u32 %v411, 2147483648
    %v413 = vmul.f32 %v412, 1.442695
    %v414 = vpow.pop %v413
    %v415 = vadd.f32 %v414, 1.0
    %v416 = vrcp.pop %v415
    %v417 = vmul.f32 1.0, %v416
    %v418 = vtanh.pop %v411
    %v419 = vmul.f32 %v417, %v321
    %421 = vrot.lane.b32.xlu0 %v418, 64
    %v422 = vpop.permute.xlu0 %421
    %v424 = vmul.f32 %v417, %v422
    %426 = vrot.lane.b32.xlu0 %v424, 32
    %v427 = vpop.permute.xlu0 %426
    %v429 = vadd.f32 %v419, %v427
    %v430 = vtanh.pop %v429
    %432 = vrot.lane.b32.xlu0 %v430, 64
    %v433 = vpop.permute.xlu0 %432
    %v435 = vmul.f32 %v417, %v433
    %vm436 = vcmp.eq.s32.totalorder %v227, 1
    %v437 = vlaneseq
    %v438 = vshrl.u32 %v437, 7
    %v439 = vsub.s32 3, %v438
    %v440 = vrot.slane %v435, %v439
    %v441 = vsel %vm436, %v440, %v333
    %s442 = scalar_lea.vmem [#allocation2], 16
    %v443 = vld [vmem:[%s442] sm:$0xff]
    %445 = vrot.lane.b32.xlu0 %v435, 32
    %v446 = vpop.permute.xlu0 %445
    %v447 = vsel %vm229, %v446, 0
    %449 = vmatprep.subr.mxu0 0.0
    %450 = vmatpush1.msra.mxu0 0.0
    %451 = vmatprep.subr.mxu0 0.0
    %452 = vmatpush1.msra.mxu0 0.0
    %453 = vmatprep.subr.mxu0 0.0
    %454 = vmatpush1.msra.mxu0 0.0
    %455 = vmatprep.subr.mxu0 0.0
    %456 = vmatpush1.msra.mxu0 0.0
    %457 = vmatprep.subr.mxu0 0.0
    %458 = vmatpush1.msra.mxu0 0.0
    %459 = vmatprep.subr.mxu0 0.0
    %460 = vmatpush1.msra.mxu0 0.0
    %461 = vmatprep.subr.mxu0 0.0
    %462 = vmatpush1.msra.mxu0 0.0
    %463 = vmatprep.subr.mxu0 0.0
    %464 = vmatpush1.msra.mxu0 0.0
    %465 = vmatprep.subr.mxu0 0.0
    %466 = vmatpush1.msra.mxu0 0.0
    %467 = vmatprep.subr.mxu0 0.0
    %468 = vmatpush1.msra.mxu0 0.0
    %469 = vmatprep.subr.mxu0 0.0
    %470 = vmatpush1.msra.mxu0 0.0
    %471 = vmatprep.subr.mxu0 0.0
    %472 = vmatpush1.msra.mxu0 0.0
    %473 = vmatprep.subr.mxu0 0.0
    %474 = vmatpush1.msra.mxu0 %v225
    %475 = vmatprep.subr.mxu0 0.0
    %476 = vmatpush1.msra.mxu0 %v224
    %477 = vmatprep.subr.mxu0 0.0
    %478 = vmatpush1.msra.mxu0 %v223
    %479 = vmatprep.subr.mxu0 0.0
    %480 = vmatpush1.msra.mxu0 %v222
    %481 = vmatprep.subr.mxu0 0.0
    %482 = vmatpush2.msra.mxu0 0.0
    %483 = vmatprep.subr.mxu0 0.0
    %484 = vmatpush2.msra.mxu0 0.0
    %485 = vmatprep.subr.mxu0 0.0
    %486 = vmatpush2.msra.mxu0 0.0
    %487 = vmatprep.subr.mxu0 0.0
    %488 = vmatpush2.msra.mxu0 0.0
    %489 = vmatprep.subr.mxu0 0.0
    %490 = vmatpush2.msra.mxu0 0.0
    %491 = vmatprep.subr.mxu0 0.0
    %492 = vmatpush2.msra.mxu0 0.0
    %493 = vmatprep.subr.mxu0 0.0
    %494 = vmatpush2.msra.mxu0 0.0
    %495 = vmatprep.subr.mxu0 0.0
    %496 = vmatpush2.msra.mxu0 0.0
    %497 = vmatprep.subr.mxu0 0.0
    %498 = vmatpush2.msra.mxu0 0.0
    %499 = vmatprep.subr.mxu0 0.0
    %500 = vmatpush2.msra.mxu0 0.0
    %501 = vmatprep.subr.mxu0 0.0
    %502 = vmatpush2.msra.mxu0 0.0
    %503 = vmatprep.subr.mxu0 0.0
    %504 = vmatpush2.msra.mxu0 0.0
    %505 = vmatprep.subr.mxu0 0.0
    %506 = vmatpush2.msra.mxu0 0.0
    %507 = vmatprep.subr.mxu0 0.0
    %508 = vmatpush2.msra.mxu0 0.0
    %509 = vmatprep.subr.mxu0 0.0
    %510 = vmatpush2.msra.mxu0 0.0
    %511 = vmatprep.subr.mxu0 0.0
    %512 = vmatpush2.msra.mxu0 0.0
    %513 = vmatprep.mubr.f32.mxu0 0.0
    %514 = vmatmul.mubr.f32.gmra.mxu0 %v447
    %v515 = vpop.f32.mrf.mxu0
    %v516 = vadd.f32 0.0, %v515
    %v517 = vpop.f32.mrf.mxu0
    %518 = vdwg.mxu0
    %v519 = vadd.f32 %v443, %v516
    %v520 = vxor.u32 %v519, 2147483648
    %v521 = vmul.f32 %v520, 1.442695
    %v522 = vpow.pop %v521
    %v523 = vadd.f32 %v522, 1.0
    %v524 = vrcp.pop %v523
    %v525 = vmul.f32 1.0, %v524
    %v526 = vtanh.pop %v519
    %v527 = vmul.f32 %v525, %v429
    %529 = vrot.lane.b32.xlu0 %v526, 64
    %v530 = vpop.permute.xlu0 %529
    %v532 = vmul.f32 %v525, %v530
    %534 = vrot.lane.b32.xlu0 %v532, 32
    %v535 = vpop.permute.xlu0 %534
    %v537 = vadd.f32 %v527, %v535
    %v538 = vtanh.pop %v537
    %540 = vrot.lane.b32.xlu0 %v538, 64
    %v541 = vpop.permute.xlu0 %540
    %v543 = vmul.f32 %v525, %v541
    %vm544 = vcmp.eq.s32.totalorder %v227, 2
    %v545 = vlaneseq
    %v546 = vshrl.u32 %v545, 7
    %v547 = vsub.s32 3, %v546
    %v548 = vrot.slane %v543, %v547
    %v549 = vsel %vm544, %v548, %v441
    %s550 = scalar_lea.vmem [#allocation2], 24
    %v551 = vld [vmem:[%s550] sm:$0xff]
    %553 = vrot.lane.b32.xlu0 %v543, 32
    %v554 = vpop.permute.xlu0 %553
    %v555 = vsel %vm229, %v554, 0
    %557 = vmatprep.subr.mxu0 0.0
    %558 = vmatpush1.msra.mxu0 0.0
    %559 = vmatprep.subr.mxu0 0.0
    %560 = vmatpush1.msra.mxu0 0.0
    %561 = vmatprep.subr.mxu0 0.0
    %562 = vmatpush1.msra.mxu0 0.0
    %563 = vmatprep.subr.mxu0 0.0
    %564 = vmatpush1.msra.mxu0 0.0
    %565 = vmatprep.subr.mxu0 0.0
    %566 = vmatpush1.msra.mxu0 0.0
    %567 = vmatprep.subr.mxu0 0.0
    %568 = vmatpush1.msra.mxu0 0.0
    %569 = vmatprep.subr.mxu0 0.0
    %570 = vmatpush1.msra.mxu0 0.0
    %571 = vmatprep.subr.mxu0 0.0
    %572 = vmatpush1.msra.mxu0 0.0
    %573 = vmatprep.subr.mxu0 0.0
    %574 = vmatpush1.msra.mxu0 0.0
    %575 = vmatprep.subr.mxu0 0.0
    %576 = vmatpush1.msra.mxu0 0.0
    %577 = vmatprep.subr.mxu0 0.0
    %578 = vmatpush1.msra.mxu0 0.0
    %579 = vmatprep.subr.mxu0 0.0
    %580 = vmatpush1.msra.mxu0 0.0
    %581 = vmatprep.subr.mxu0 0.0
    %582 = vmatpush1.msra.mxu0 %v225
    %583 = vmatprep.subr.mxu0 0.0
    %584 = vmatpush1.msra.mxu0 %v224
    %585 = vmatprep.subr.mxu0 0.0
    %586 = vmatpush1.msra.mxu0 %v223
    %587 = vmatprep.subr.mxu0 0.0
    %588 = vmatpush1.msra.mxu0 %v222
    %589 = vmatprep.subr.mxu0 0.0
    %590 = vmatpush2.msra.mxu0 0.0
    %591 = vmatprep.subr.mxu0 0.0
    %592 = vmatpush2.msra.mxu0 0.0
    %593 = vmatprep.subr.mxu0 0.0
    %594 = vmatpush2.msra.mxu0 0.0
    %595 = vmatprep.subr.mxu0 0.0
    %596 = vmatpush2.msra.mxu0 0.0
    %597 = vmatprep.subr.mxu0 0.0
    %598 = vmatpush2.msra.mxu0 0.0
    %599 = vmatprep.subr.mxu0 0.0
    %600 = vmatpush2.msra.mxu0 0.0
    %601 = vmatprep.subr.mxu0 0.0
    %602 = vmatpush2.msra.mxu0 0.0
    %603 = vmatprep.subr.mxu0 0.0
    %604 = vmatpush2.msra.mxu0 0.0
    %605 = vmatprep.subr.mxu0 0.0
    %606 = vmatpush2.msra.mxu0 0.0
    %607 = vmatprep.subr.mxu0 0.0
    %608 = vmatpush2.msra.mxu0 0.0
    %609 = vmatprep.subr.mxu0 0.0
    %610 = vmatpush2.msra.mxu0 0.0
    %611 = vmatprep.subr.mxu0 0.0
    %612 = vmatpush2.msra.mxu0 0.0
    %613 = vmatprep.subr.mxu0 0.0
    %614 = vmatpush2.msra.mxu0 0.0
    %615 = vmatprep.subr.mxu0 0.0
    %616 = vmatpush2.msra.mxu0 0.0
    %617 = vmatprep.subr.mxu0 0.0
    %618 = vmatpush2.msra.mxu0 0.0
    %619 = vmatprep.subr.mxu0 0.0
    %620 = vmatpush2.msra.mxu0 0.0
    %621 = vmatprep.mubr.f32.mxu0 0.0
    %622 = vmatmul.mubr.f32.gmra.mxu0 %v555
    %v623 = vpop.f32.mrf.mxu0
    %v624 = vadd.f32 0.0, %v623
    %v625 = vpop.f32.mrf.mxu0
    %626 = vdwg.mxu0
    %v627 = vadd.f32 %v551, %v624
    %v628 = vxor.u32 %v627, 2147483648
    %v629 = vmul.f32 %v628, 1.442695
    %v630 = vpow.pop %v629
    %v631 = vadd.f32 %v630, 1.0
    %v632 = vrcp.pop %v631
    %v633 = vmul.f32 1.0, %v632
    %v634 = vtanh.pop %v627
    %v635 = vmul.f32 %v633, %v537
    %637 = vrot.lane.b32.xlu0 %v634, 64
    %v638 = vpop.permute.xlu0 %637
    %v640 = vmul.f32 %v633, %v638
    %642 = vrot.lane.b32.xlu0 %v640, 32
    %v643 = vpop.permute.xlu0 %642
    %v645 = vadd.f32 %v635, %v643
    %v646 = vtanh.pop %v645
    %648 = vrot.lane.b32.xlu0 %v646, 64
    %v649 = vpop.permute.xlu0 %648
    %v651 = vmul.f32 %v633, %v649
    %vm652 = vcmp.eq.s32.totalorder %v227, 3
    %v653 = vlaneseq
    %v654 = vshrl.u32 %v653, 7
    %v655 = vsub.s32 3, %v654
    %v656 = vrot.slane %v651, %v655
    %v657 = vsel %vm652, %v656, %v549
    %s658 = scalar_lea.vmem [#allocation2], 32
    %v659 = vld [vmem:[%s658] sm:$0xff]
    %661 = vrot.lane.b32.xlu0 %v651, 32
    %v662 = vpop.permute.xlu0 %661
    %v663 = vsel %vm229, %v662, 0
    %665 = vmatprep.subr.mxu0 0.0
    %666 = vmatpush1.msra.mxu0 0.0
    %667 = vmatprep.subr.mxu0 0.0
    %668 = vmatpush1.msra.mxu0 0.0
    %669 = vmatprep.subr.mxu0 0.0
    %670 = vmatpush1.msra.mxu0 0.0
    %671 = vmatprep.subr.mxu0 0.0
    %672 = vmatpush1.msra.mxu0 0.0
    %673 = vmatprep.subr.mxu0 0.0
    %674 = vmatpush1.msra.mxu0 0.0
    %675 = vmatprep.subr.mxu0 0.0
    %676 = vmatpush1.msra.mxu0 0.0
    %677 = vmatprep.subr.mxu0 0.0
    %678 = vmatpush1.msra.mxu0 0.0
    %679 = vmatprep.subr.mxu0 0.0
    %680 = vmatpush1.msra.mxu0 0.0
    %681 = vmatprep.subr.mxu0 0.0
    %682 = vmatpush1.msra.mxu0 0.0
    %683 = vmatprep.subr.mxu0 0.0
    %684 = vmatpush1.msra.mxu0 0.0
    %685 = vmatprep.subr.mxu0 0.0
    %686 = vmatpush1.msra.mxu0 0.0
    %687 = vmatprep.subr.mxu0 0.0
    %688 = vmatpush1.msra.mxu0 0.0
    %689 = vmatprep.subr.mxu0 0.0
    %690 = vmatpush1.msra.mxu0 %v225
    %691 = vmatprep.subr.mxu0 0.0
    %692 = vmatpush1.msra.mxu0 %v224
    %693 = vmatprep.subr.mxu0 0.0
    %694 = vmatpush1.msra.mxu0 %v223
    %695 = vmatprep.subr.mxu0 0.0
    %696 = vmatpush1.msra.mxu0 %v222
    %697 = vmatprep.subr.mxu0 0.0
    %698 = vmatpush2.msra.mxu0 0.0
    %699 = vmatprep.subr.mxu0 0.0
    %700 = vmatpush2.msra.mxu0 0.0
    %701 = vmatprep.subr.mxu0 0.0
    %702 = vmatpush2.msra.mxu0 0.0
    %703 = vmatprep.subr.mxu0 0.0
    %704 = vmatpush2.msra.mxu0 0.0
    %705 = vmatprep.subr.mxu0 0.0
    %706 = vmatpush2.msra.mxu0 0.0
    %707 = vmatprep.subr.mxu0 0.0
    %708 = vmatpush2.msra.mxu0 0.0
    %709 = vmatprep.subr.mxu0 0.0
    %710 = vmatpush2.msra.mxu0 0.0
    %711 = vmatprep.subr.mxu0 0.0
    %712 = vmatpush2.msra.mxu0 0.0
    %713 = vmatprep.subr.mxu0 0.0
    %714 = vmatpush2.msra.mxu0 0.0
    %715 = vmatprep.subr.mxu0 0.0
    %716 = vmatpush2.msra.mxu0 0.0
    %717 = vmatprep.subr.mxu0 0.0
    %718 = vmatpush2.msra.mxu0 0.0
    %719 = vmatprep.subr.mxu0 0.0
    %720 = vmatpush2.msra.mxu0 0.0
    %721 = vmatprep.subr.mxu0 0.0
    %722 = vmatpush2.msra.mxu0 0.0
    %723 = vmatprep.subr.mxu0 0.0
    %724 = vmatpush2.msra.mxu0 0.0
    %725 = vmatprep.subr.mxu0 0.0
    %726 = vmatpush2.msra.mxu0 0.0
    %727 = vmatprep.subr.mxu0 0.0
    %728 = vmatpush2.msra.mxu0 0.0
    %729 = vmatprep.mubr.f32.mxu0 0.0
    %730 = vmatmul.mubr.f32.gmra.mxu0 %v663
    %v731 = vpop.f32.mrf.mxu0
    %v732 = vadd.f32 0.0, %v731
    %v733 = vpop.f32.mrf.mxu0
    %734 = vdwg.mxu0
    %v735 = vadd.f32 %v659, %v732
    %v736 = vxor.u32 %v735, 2147483648
    %v737 = vmul.f32 %v736, 1.442695
    %v738 = vpow.pop %v737
    %v739 = vadd.f32 %v738, 1.0
    %v740 = vrcp.pop %v739
    %v741 = vmul.f32 1.0, %v740
    %v742 = vtanh.pop %v735
    %v743 = vmul.f32 %v741, %v645
    %745 = vrot.lane.b32.xlu0 %v742, 64
    %v746 = vpop.permute.xlu0 %745
    %v748 = vmul.f32 %v741, %v746
    %750 = vrot.lane.b32.xlu0 %v748, 32
    %v751 = vpop.permute.xlu0 %750
    %v753 = vadd.f32 %v743, %v751
    %v754 = vtanh.pop %v753
    %756 = vrot.lane.b32.xlu0 %v754, 64
    %v757 = vpop.permute.xlu0 %756
    %v759 = vmul.f32 %v741, %v757
    %vm760 = vcmp.eq.s32.totalorder %v227, 4
    %v761 = vlaneseq
    %v762 = vshrl.u32 %v761, 7
    %v763 = vsub.s32 3, %v762
    %v764 = vrot.slane %v759, %v763
    %v765 = vsel %vm760, %v764, %v657
    %s766 = scalar_lea.vmem [#allocation2], 40
    %v767 = vld [vmem:[%s766] sm:$0xff]
    %769 = vrot.lane.b32.xlu0 %v759, 32
    %v770 = vpop.permute.xlu0 %769
    %v771 = vsel %vm229, %v770, 0
    %773 = vmatprep.subr.mxu0 0.0
    %774 = vmatpush1.msra.mxu0 0.0
    %775 = vmatprep.subr.mxu0 0.0
    %776 = vmatpush1.msra.mxu0 0.0
    %777 = vmatprep.subr.mxu0 0.0
    %778 = vmatpush1.msra.mxu0 0.0
    %779 = vmatprep.subr.mxu0 0.0
    %780 = vmatpush1.msra.mxu0 0.0
    %781 = vmatprep.subr.mxu0 0.0
    %782 = vmatpush1.msra.mxu0 0.0
    %783 = vmatprep.subr.mxu0 0.0
    %784 = vmatpush1.msra.mxu0 0.0
    %785 = vmatprep.subr.mxu0 0.0
    %786 = vmatpush1.msra.mxu0 0.0
    %787 = vmatprep.subr.mxu0 0.0
    %788 = vmatpush1.msra.mxu0 0.0
    %789 = vmatprep.subr.mxu0 0.0
    %790 = vmatpush1.msra.mxu0 0.0
    %791 = vmatprep.subr.mxu0 0.0
    %792 = vmatpush1.msra.mxu0 0.0
    %793 = vmatprep.subr.mxu0 0.0
    %794 = vmatpush1.msra.mxu0 0.0
    %795 = vmatprep.subr.mxu0 0.0
    %796 = vmatpush1.msra.mxu0 0.0
    %797 = vmatprep.subr.mxu0 0.0
    %798 = vmatpush1.msra.mxu0 %v225
    %799 = vmatprep.subr.mxu0 0.0
    %800 = vmatpush1.msra.mxu0 %v224
    %801 = vmatprep.subr.mxu0 0.0
    %802 = vmatpush1.msra.mxu0 %v223
    %803 = vmatprep.subr.mxu0 0.0
    %804 = vmatpush1.msra.mxu0 %v222
    %805 = vmatprep.subr.mxu0 0.0
    %806 = vmatpush2.msra.mxu0 0.0
    %807 = vmatprep.subr.mxu0 0.0
    %808 = vmatpush2.msra.mxu0 0.0
    %809 = vmatprep.subr.mxu0 0.0
    %810 = vmatpush2.msra.mxu0 0.0
    %811 = vmatprep.subr.mxu0 0.0
    %812 = vmatpush2.msra.mxu0 0.0
    %813 = vmatprep.subr.mxu0 0.0
    %814 = vmatpush2.msra.mxu0 0.0
    %815 = vmatprep.subr.mxu0 0.0
    %816 = vmatpush2.msra.mxu0 0.0
    %817 = vmatprep.subr.mxu0 0.0
    %818 = vmatpush2.msra.mxu0 0.0
    %819 = vmatprep.subr.mxu0 0.0
    %820 = vmatpush2.msra.mxu0 0.0
    %821 = vmatprep.subr.mxu0 0.0
    %822 = vmatpush2.msra.mxu0 0.0
    %823 = vmatprep.subr.mxu0 0.0
    %824 = vmatpush2.msra.mxu0 0.0
    %825 = vmatprep.subr.mxu0 0.0
    %826 = vmatpush2.msra.mxu0 0.0
    %827 = vmatprep.subr.mxu0 0.0
    %828 = vmatpush2.msra.mxu0 0.0
    %829 = vmatprep.subr.mxu0 0.0
    %830 = vmatpush2.msra.mxu0 0.0
    %831 = vmatprep.subr.mxu0 0.0
    %832 = vmatpush2.msra.mxu0 0.0
    %833 = vmatprep.subr.mxu0 0.0
    %834 = vmatpush2.msra.mxu0 0.0
    %835 = vmatprep.subr.mxu0 0.0
    %836 = vmatpush2.msra.mxu0 0.0
    %837 = vmatprep.mubr.f32.mxu0 0.0
    %838 = vmatmul.mubr.f32.gmra.mxu0 %v771
    %v839 = vpop.f32.mrf.mxu0
    %v840 = vadd.f32 0.0, %v839
    %v841 = vpop.f32.mrf.mxu0
    %842 = vdwg.mxu0
    %v843 = vadd.f32 %v767, %v840
    %v844 = vxor.u32 %v843, 2147483648
    %v845 = vmul.f32 %v844, 1.442695
    %v846 = vpow.pop %v845
    %v847 = vadd.f32 %v846, 1.0
    %v848 = vrcp.pop %v847
    %v849 = vmul.f32 1.0, %v848
    %v850 = vtanh.pop %v843
    %v851 = vmul.f32 %v849, %v753
    %853 = vrot.lane.b32.xlu0 %v850, 64
    %v854 = vpop.permute.xlu0 %853
    %v856 = vmul.f32 %v849, %v854
    %858 = vrot.lane.b32.xlu0 %v856, 32
    %v859 = vpop.permute.xlu0 %858
    %v861 = vadd.f32 %v851, %v859
    %v862 = vtanh.pop %v861
    %864 = vrot.lane.b32.xlu0 %v862, 64
    %v865 = vpop.permute.xlu0 %864
    %v867 = vmul.f32 %v849, %v865
    %vm868 = vcmp.eq.s32.totalorder %v227, 5
    %v869 = vlaneseq
    %v870 = vshrl.u32 %v869, 7
    %v871 = vsub.s32 3, %v870
    %v872 = vrot.slane %v867, %v871
    %v873 = vsel %vm868, %v872, %v765
    %s874 = scalar_lea.vmem [#allocation2], 48
    %v875 = vld [vmem:[%s874] sm:$0xff]
    %877 = vrot.lane.b32.xlu0 %v867, 32
    %v878 = vpop.permute.xlu0 %877
    %v879 = vsel %vm229, %v878, 0
    %881 = vmatprep.subr.mxu0 0.0
    %882 = vmatpush1.msra.mxu0 0.0
    %883 = vmatprep.subr.mxu0 0.0
    %884 = vmatpush1.msra.mxu0 0.0
    %885 = vmatprep.subr.mxu0 0.0
    %886 = vmatpush1.msra.mxu0 0.0
    %887 = vmatprep.subr.mxu0 0.0
    %888 = vmatpush1.msra.mxu0 0.0
    %889 = vmatprep.subr.mxu0 0.0
    %890 = vmatpush1.msra.mxu0 0.0
    %891 = vmatprep.subr.mxu0 0.0
    %892 = vmatpush1.msra.mxu0 0.0
    %893 = vmatprep.subr.mxu0 0.0
    %894 = vmatpush1.msra.mxu0 0.0
    %895 = vmatprep.subr.mxu0 0.0
    %896 = vmatpush1.msra.mxu0 0.0
    %897 = vmatprep.subr.mxu0 0.0
    %898 = vmatpush1.msra.mxu0 0.0
    %899 = vmatprep.subr.mxu0 0.0
    %900 = vmatpush1.msra.mxu0 0.0
    %901 = vmatprep.subr.mxu0 0.0
    %902 = vmatpush1.msra.mxu0 0.0
    %903 = vmatprep.subr.mxu0 0.0
    %904 = vmatpush1.msra.mxu0 0.0
    %905 = vmatprep.subr.mxu0 0.0
    %906 = vmatpush1.msra.mxu0 %v225
    %907 = vmatprep.subr.mxu0 0.0
    %908 = vmatpush1.msra.mxu0 %v224
    %909 = vmatprep.subr.mxu0 0.0
    %910 = vmatpush1.msra.mxu0 %v223
    %911 = vmatprep.subr.mxu0 0.0
    %912 = vmatpush1.msra.mxu0 %v222
    %913 = vmatprep.subr.mxu0 0.0
    %914 = vmatpush2.msra.mxu0 0.0
    %915 = vmatprep.subr.mxu0 0.0
    %916 = vmatpush2.msra.mxu0 0.0
    %917 = vmatprep.subr.mxu0 0.0
    %918 = vmatpush2.msra.mxu0 0.0
    %919 = vmatprep.subr.mxu0 0.0
    %920 = vmatpush2.msra.mxu0 0.0
    %921 = vmatprep.subr.mxu0 0.0
    %922 = vmatpush2.msra.mxu0 0.0
    %923 = vmatprep.subr.mxu0 0.0
    %924 = vmatpush2.msra.mxu0 0.0
    %925 = vmatprep.subr.mxu0 0.0
    %926 = vmatpush2.msra.mxu0 0.0
    %927 = vmatprep.subr.mxu0 0.0
    %928 = vmatpush2.msra.mxu0 0.0
    %929 = vmatprep.subr.mxu0 0.0
    %930 = vmatpush2.msra.mxu0 0.0
    %931 = vmatprep.subr.mxu0 0.0
    %932 = vmatpush2.msra.mxu0 0.0
    %933 = vmatprep.subr.mxu0 0.0
    %934 = vmatpush2.msra.mxu0 0.0
    %935 = vmatprep.subr.mxu0 0.0
    %936 = vmatpush2.msra.mxu0 0.0
    %937 = vmatprep.subr.mxu0 0.0
    %938 = vmatpush2.msra.mxu0 0.0
    %939 = vmatprep.subr.mxu0 0.0
    %940 = vmatpush2.msra.mxu0 0.0
    %941 = vmatprep.subr.mxu0 0.0
    %942 = vmatpush2.msra.mxu0 0.0
    %943 = vmatprep.subr.mxu0 0.0
    %944 = vmatpush2.msra.mxu0 0.0
    %945 = vmatprep.mubr.f32.mxu0 0.0
    %946 = vmatmul.mubr.f32.gmra.mxu0 %v879
    %v947 = vpop.f32.mrf.mxu0
    %v948 = vadd.f32 0.0, %v947
    %v949 = vpop.f32.mrf.mxu0
    %950 = vdwg.mxu0
    %v951 = vadd.f32 %v875, %v948
    %v952 = vxor.u32 %v951, 2147483648
    %v953 = vmul.f32 %v952, 1.442695
    %v954 = vpow.pop %v953
    %v955 = vadd.f32 %v954, 1.0
    %v956 = vrcp.pop %v955
    %v957 = vmul.f32 1.0, %v956
    %v958 = vtanh.pop %v951
    %v959 = vmul.f32 %v957, %v861
    %961 = vrot.lane.b32.xlu0 %v958, 64
    %v962 = vpop.permute.xlu0 %961
    %v964 = vmul.f32 %v957, %v962
    %966 = vrot.lane.b32.xlu0 %v964, 32
    %v967 = vpop.permute.xlu0 %966
    %v969 = vadd.f32 %v959, %v967
    %v970 = vtanh.pop %v969
    %972 = vrot.lane.b32.xlu0 %v970, 64
    %v973 = vpop.permute.xlu0 %972
    %v975 = vmul.f32 %v957, %v973
    %vm976 = vcmp.eq.s32.totalorder %v227, 6
    %v977 = vlaneseq
    %v978 = vshrl.u32 %v977, 7
    %v979 = vsub.s32 3, %v978
    %v980 = vrot.slane %v975, %v979
    %v981 = vsel %vm976, %v980, %v873
    %s982 = scalar_lea.vmem [#allocation2], 56
    %v983 = vld [vmem:[%s982] sm:$0xff]
    %985 = vrot.lane.b32.xlu0 %v975, 32
    %v986 = vpop.permute.xlu0 %985
    %v987 = vsel %vm229, %v986, 0
    %989 = vmatprep.subr.mxu0 0.0
    %990 = vmatpush1.msra.mxu0 0.0
    %991 = vmatprep.subr.mxu0 0.0
    %992 = vmatpush1.msra.mxu0 0.0
    %993 = vmatprep.subr.mxu0 0.0
    %994 = vmatpush1.msra.mxu0 0.0
    %995 = vmatprep.subr.mxu0 0.0
    %996 = vmatpush1.msra.mxu0 0.0
    %997 = vmatprep.subr.mxu0 0.0
    %998 = vmatpush1.msra.mxu0 0.0
    %999 = vmatprep.subr.mxu0 0.0
    %1000 = vmatpush1.msra.mxu0 0.0
    %1001 = vmatprep.subr.mxu0 0.0
    %1002 = vmatpush1.msra.mxu0 0.0
    %1003 = vmatprep.subr.mxu0 0.0
    %1004 = vmatpush1.msra.mxu0 0.0
    %1005 = vmatprep.subr.mxu0 0.0
    %1006 = vmatpush1.msra.mxu0 0.0
    %1007 = vmatprep.subr.mxu0 0.0
    %1008 = vmatpush1.msra.mxu0 0.0
    %1009 = vmatprep.subr.mxu0 0.0
    %1010 = vmatpush1.msra.mxu0 0.0
    %1011 = vmatprep.subr.mxu0 0.0
    %1012 = vmatpush1.msra.mxu0 0.0
    %1013 = vmatprep.subr.mxu0 0.0
    %1014 = vmatpush1.msra.mxu0 %v225
    %1015 = vmatprep.subr.mxu0 0.0
    %1016 = vmatpush1.msra.mxu0 %v224
    %1017 = vmatprep.subr.mxu0 0.0
    %1018 = vmatpush1.msra.mxu0 %v223
    %1019 = vmatprep.subr.mxu0 0.0
    %1020 = vmatpush1.msra.mxu0 %v222
    %1021 = vmatprep.subr.mxu0 0.0
    %1022 = vmatpush2.msra.mxu0 0.0
    %1023 = vmatprep.subr.mxu0 0.0
    %1024 = vmatpush2.msra.mxu0 0.0
    %1025 = vmatprep.subr.mxu0 0.0
    %1026 = vmatpush2.msra.mxu0 0.0
    %1027 = vmatprep.subr.mxu0 0.0
    %1028 = vmatpush2.msra.mxu0 0.0
    %1029 = vmatprep.subr.mxu0 0.0
    %1030 = vmatpush2.msra.mxu0 0.0
    %1031 = vmatprep.subr.mxu0 0.0
    %1032 = vmatpush2.msra.mxu0 0.0
    %1033 = vmatprep.subr.mxu0 0.0
    %1034 = vmatpush2.msra.mxu0 0.0
    %1035 = vmatprep.subr.mxu0 0.0
    %1036 = vmatpush2.msra.mxu0 0.0
    %1037 = vmatprep.subr.mxu0 0.0
    %1038 = vmatpush2.msra.mxu0 0.0
    %1039 = vmatprep.subr.mxu0 0.0
    %1040 = vmatpush2.msra.mxu0 0.0
    %1041 = vmatprep.subr.mxu0 0.0
    %1042 = vmatpush2.msra.mxu0 0.0
    %1043 = vmatprep.subr.mxu0 0.0
    %1044 = vmatpush2.msra.mxu0 0.0
    %1045 = vmatprep.subr.mxu0 0.0
    %1046 = vmatpush2.msra.mxu0 0.0
    %1047 = vmatprep.subr.mxu0 0.0
    %1048 = vmatpush2.msra.mxu0 0.0
    %1049 = vmatprep.subr.mxu0 0.0
    %1050 = vmatpush2.msra.mxu0 0.0
    %1051 = vmatprep.subr.mxu0 0.0
    %1052 = vmatpush2.msra.mxu0 0.0
    %1053 = vmatprep.mubr.f32.mxu0 0.0
    %1054 = vmatmul.mubr.f32.gmra.mxu0 %v987
    %v1055 = vpop.f32.mrf.mxu0
    %v1056 = vadd.f32 0.0, %v1055
    %v1057 = vpop.f32.mrf.mxu0
    %1058 = vdwg.mxu0
    %v1059 = vadd.f32 %v983, %v1056
    %v1060 = vxor.u32 %v1059, 2147483648
    %v1061 = vmul.f32 %v1060, 1.442695
    %v1062 = vpow.pop %v1061
    %v1063 = vadd.f32 %v1062, 1.0
    %v1064 = vrcp.pop %v1063
    %v1065 = vmul.f32 1.0, %v1064
    %v1066 = vtanh.pop %v1059
    %v1067 = vmul.f32 %v1065, %v969
    %1069 = vrot.lane.b32.xlu0 %v1066, 64
    %v1070 = vpop.permute.xlu0 %1069
    %v1072 = vmul.f32 %v1065, %v1070
    %1074 = vrot.lane.b32.xlu0 %v1072, 32
    %v1075 = vpop.permute.xlu0 %1074
    %v1077 = vadd.f32 %v1067, %v1075
    %v1078 = vtanh.pop %v1077
    %1080 = vrot.lane.b32.xlu0 %v1078, 64
    %v1081 = vpop.permute.xlu0 %1080
    %v1083 = vmul.f32 %v1065, %v1081
    %vm1084 = vcmp.eq.s32.totalorder %v227, 7
    %v1085 = vlaneseq
    %v1086 = vshrl.u32 %v1085, 7
    %v1087 = vsub.s32 3, %v1086
    %v1088 = vrot.slane %v1083, %v1087
    %v1089 = vsel %vm1084, %v1088, %v981
    %v1090 = vld [vmem:[%s3] sm:$0xff]
    %v1091 = vld [vmem:[%s3 + $0x8] sm:$0xff]
    %v1092 = vld [vmem:[%s3 + $0x10] sm:$0xff]
    %v1093 = vld [vmem:[%s3 + $0x18] sm:$0xff]
    %v1094 = vld [vmem:[%s4] sm:$0x1]
    %v1096 = vlaneseq
    %v1097 = vshrl.u32 %v1096, 7
    %v1098 = vsub.s32 0, %v1097
    %v1099 = vrot.slane %v1094, %v1098
    %1102 = vrot.lane.b32.xlu0 %v1089, 32
    %v1103 = vpop.permute.xlu0 %1102
    %v1104 = vsel %vm229, %v1103, 0
    %1106 = vmatprep.subr.mxu0 0.0
    %1107 = vmatpush1.msra.mxu0 0.0
    %1108 = vmatprep.subr.mxu0 0.0
    %1109 = vmatpush1.msra.mxu0 0.0
    %1110 = vmatprep.subr.mxu0 0.0
    %1111 = vmatpush1.msra.mxu0 0.0
    %1112 = vmatprep.subr.mxu0 0.0
    %1113 = vmatpush1.msra.mxu0 0.0
    %1114 = vmatprep.subr.mxu0 0.0
    %1115 = vmatpush1.msra.mxu0 0.0
    %1116 = vmatprep.subr.mxu0 0.0
    %1117 = vmatpush1.msra.mxu0 0.0
    %1118 = vmatprep.subr.mxu0 0.0
    %1119 = vmatpush1.msra.mxu0 0.0
    %1120 = vmatprep.subr.mxu0 0.0
    %1121 = vmatpush1.msra.mxu0 0.0
    %1122 = vmatprep.subr.mxu0 0.0
    %1123 = vmatpush1.msra.mxu0 0.0
    %1124 = vmatprep.subr.mxu0 0.0
    %1125 = vmatpush1.msra.mxu0 0.0
    %1126 = vmatprep.subr.mxu0 0.0
    %1127 = vmatpush1.msra.mxu0 0.0
    %1128 = vmatprep.subr.mxu0 0.0
    %1129 = vmatpush1.msra.mxu0 0.0
    %1130 = vmatprep.subr.mxu0 0.0
    %1131 = vmatpush1.msra.mxu0 %v1093
    %1132 = vmatprep.subr.mxu0 0.0
    %1133 = vmatpush1.msra.mxu0 %v1092
    %1134 = vmatprep.subr.mxu0 0.0
    %1135 = vmatpush1.msra.mxu0 %v1091
    %1136 = vmatprep.subr.mxu0 0.0
    %1137 = vmatpush1.msra.mxu0 %v1090
    %1138 = vmatprep.subr.mxu0 0.0
    %1139 = vmatpush2.msra.mxu0 0.0
    %1140 = vmatprep.subr.mxu0 0.0
    %1141 = vmatpush2.msra.mxu0 0.0
    %1142 = vmatprep.subr.mxu0 0.0
    %1143 = vmatpush2.msra.mxu0 0.0
    %1144 = vmatprep.subr.mxu0 0.0
    %1145 = vmatpush2.msra.mxu0 0.0
    %1146 = vmatprep.subr.mxu0 0.0
    %1147 = vmatpush2.msra.mxu0 0.0
    %1148 = vmatprep.subr.mxu0 0.0
    %1149 = vmatpush2.msra.mxu0 0.0
    %1150 = vmatprep.subr.mxu0 0.0
    %1151 = vmatpush2.msra.mxu0 0.0
    %1152 = vmatprep.subr.mxu0 0.0
    %1153 = vmatpush2.msra.mxu0 0.0
    %1154 = vmatprep.subr.mxu0 0.0
    %1155 = vmatpush2.msra.mxu0 0.0
    %1156 = vmatprep.subr.mxu0 0.0
    %1157 = vmatpush2.msra.mxu0 0.0
    %1158 = vmatprep.subr.mxu0 0.0
    %1159 = vmatpush2.msra.mxu0 0.0
    %1160 = vmatprep.subr.mxu0 0.0
    %1161 = vmatpush2.msra.mxu0 0.0
    %1162 = vmatprep.subr.mxu0 0.0
    %1163 = vmatpush2.msra.mxu0 0.0
    %1164 = vmatprep.subr.mxu0 0.0
    %1165 = vmatpush2.msra.mxu0 0.0
    %1166 = vmatprep.subr.mxu0 0.0
    %1167 = vmatpush2.msra.mxu0 0.0
    %1168 = vmatprep.subr.mxu0 0.0
    %1169 = vmatpush2.msra.mxu0 0.0
    %1170 = vmatprep.mubr.f32.mxu0 0.0
    %1171 = vmatmul.mubr.f32.gmra.mxu0 %v1104
    %v1172 = vpop.f32.mrf.mxu0
    %v1173 = vadd.f32 %v1099, %v1172
    %v1174 = vpop.f32.mrf.mxu0
    %1175 = vdwg.mxu0
    %1176 = vst [vmem:[#allocation6] sm:$0xff] %v1173
    // Predicated region
    $region26: #{tpu_custom_call.1} parent=1 // pred_check
      _
    $region27: #{tpu_custom_call.1} parent=1 // pred_check_branch
      %1178 = sbr.rel (0) target = $region29
    $region28: #{tpu_custom_call.1} parent=1 // pred_region
      %s1180 = ssub.s32 128, 128
      %1181 = vsyncadd [#allocation5], %s1180
      %s1183 = sshll.u32 [#allocation6], 4
      %s1184 = int_to_ptr.vmem [resolvable:$true] %s1183
      %1186 = dma.vmem_to_hbm [thread:$0]  %s1184, 128, %s5, [#allocation5]
    $region29: #{tpu_custom_call.1} parent=1 // pred_fallthru
      _
    // Predicated region
    $region30: #{tpu_custom_call.1} parent=1 // pred_check
      _
    $region31: #{tpu_custom_call.1} parent=1 // pred_check_branch
      %1188 = sbr.rel (0) target = $region33
    $region32: #{tpu_custom_call.1} parent=1 // pred_region
      %1189 = dma.done [#allocation5], 128
    $region33: #{tpu_custom_call.1} parent=1 // pred_fallthru
      _
    %1190 = vsyncpa [#allocation4], 1
    %1191 = vsyncpa [#allocation5], 1

</llo_original>
